<compile_context>
chip_gen: v7x
topology: tpu7x:2x2x1
jax: 0.10.0
libtpu: 0.0.40
codegen_flags: <defaults>
</compile_context>

<pallas_src>
import jax
import jax.numpy as jnp
from jax.experimental import pallas as pl
from jax.experimental.pallas import tpu as pltpu


def _vgae_kernel(x_ref, adj_ref, w1_ref, b1_ref, wmulv_ref, eps_ref,
                 wd_ref, bd_ref, decode_ref, mulv_ref):
    f32 = jnp.float32
    bf16 = jnp.bfloat16

    adj = adj_ref[...]                                   # (N, N) bf16
    x = x_ref[...]                                       # (N, F) bf16

    # ---- encoder: GCN layer 1 ----
    ax = jnp.dot(adj, x, preferred_element_type=f32)     # (N, F) f32 acc
    pre = jnp.dot(ax.astype(bf16), w1_ref[...],
                  preferred_element_type=f32) + b1_ref[...]
    h = jnp.maximum(pre, 0.0)                            # relu in f32

    # ---- encoder: GCN layer 2, fused mu|logvar projection ----
    ah = jnp.dot(adj, h.astype(bf16), preferred_element_type=f32)     # (N, H)
    mulv = jnp.dot(ah.astype(bf16), wmulv_ref[...],
                   preferred_element_type=f32)                        # (N, 2Z)
    Z = mulv.shape[-1] // 2
    mu = mulv[:, :Z]
    logvar = mulv[:, Z:]

    # reparameterization (f32 elementwise, EUP exp)
    z = mu + jnp.exp(0.5 * logvar) * eps_ref[...]

    # ---- decoder: adj^T @ z without materializing adj^T ----
    az = jax.lax.dot_general(
        adj, z.astype(bf16),
        dimension_numbers=(((0,), (0,)), ((), ())),      # contract adj axis 0
        preferred_element_type=f32)                      # (N, Z)
    logits = jnp.dot(az.astype(bf16), wd_ref[...],
                     preferred_element_type=f32) + bd_ref[...]
    decode_ref[...] = jax.nn.sigmoid(logits)
    mulv_ref[...] = mulv                                 # packed lane-dense out


def trainer_forward(origin, adj, params, eps):
    """Pallas implementation of Trainer.forward for a batch of B graphs."""
    B, N, F = origin.shape
    H = params["w1"].shape[1]
    Z2 = params["w_mulv"].shape[1]
    Z = Z2 // 2

    bf16 = jnp.bfloat16
    f32 = jnp.float32
    x_bf = origin.astype(bf16)
    adj_bf = adj.astype(bf16)
    w1 = params["w1"].astype(bf16)
    wmulv = params["w_mulv"].astype(bf16)
    wd = params["wd"].astype(bf16)
    b1 = params["b1"].astype(f32)
    bd = params["bd"].astype(f32)

    sq = pl.Squeezed()
    in_specs = [
        pl.BlockSpec((sq, N, F), lambda b: (b, 0, 0)),    # x
        pl.BlockSpec((sq, N, N), lambda b: (b, 0, 0)),    # adj
        pl.BlockSpec((F, H), lambda b: (0, 0)),           # w1
        pl.BlockSpec((1, H), lambda b: (0, 0)),           # b1
        pl.BlockSpec((H, Z2), lambda b: (0, 0)),          # w_mulv (fused)
        pl.BlockSpec((sq, N, Z), lambda b: (b, 0, 0)),    # eps
        pl.BlockSpec((Z, F), lambda b: (0, 0)),           # wd
        pl.BlockSpec((1, F), lambda b: (0, 0)),           # bd
    ]
    out_specs = (
        pl.BlockSpec((sq, N, F), lambda b: (b, 0, 0)),    # decode
        pl.BlockSpec((sq, N, Z2), lambda b: (b, 0, 0)),   # packed mu|logvar
    )
    out_shape = (
        jax.ShapeDtypeStruct((B, N, F), f32),
        jax.ShapeDtypeStruct((B, N, Z2), f32),
    )

    decode, mulv = pl.pallas_call(
        _vgae_kernel,
        grid=(B,),
        in_specs=in_specs,
        out_specs=out_specs,
        out_shape=out_shape,
        compiler_params=pltpu.CompilerParams(
            dimension_semantics=("parallel",),            # megacore over graphs
            vmem_limit_bytes=48 * 1024 * 1024),           # fits v5e/v6e/v7x
    )(x_bf, adj_bf, w1, b1, wmulv, eps, wd, bd)

    mu = mulv[..., :Z]
    logvar = mulv[..., Z:]
    return decode, mu, logvar


def _init_params(key, feat, hidden, latent):
    ks = jax.random.split(key, 3)
    glorot = lambda k, shp: (jax.random.normal(k, shp, jnp.float32)
                             * jnp.sqrt(2.0 / (shp[0] + shp[1])))
    return {
        "w1": glorot(ks[0], (feat, hidden)),
        "b1": jnp.zeros((1, hidden), jnp.float32),
        # mu and logvar projections fused into one lane-dense (H, 2Z) weight.
        "w_mulv": glorot(ks[1], (hidden, 2 * latent)),
        "wd": glorot(ks[2], (latent, feat)),
        "bd": jnp.zeros((1, feat), jnp.float32),
    }


def _reference(origin, adj, params, eps):
    """Pure-JAX reference with the same bf16-operand / f32-accumulate numerics."""
    bf16, f32 = jnp.bfloat16, jnp.float32
    w1 = params["w1"].astype(bf16)
    wmulv = params["w_mulv"].astype(bf16)
    wd = params["wd"].astype(bf16)

    def one(xg, ag, eg):
        xg = xg.astype(bf16)
        ag = ag.astype(bf16)
        ax = jnp.dot(ag, xg, preferred_element_type=f32)
        h = jnp.maximum(jnp.dot(ax.astype(bf16), w1,
                                preferred_element_type=f32) + params["b1"], 0.0)
        ah = jnp.dot(ag, h.astype(bf16), preferred_element_type=f32)
        mulv = jnp.dot(ah.astype(bf16), wmulv, preferred_element_type=f32)
        Z = mulv.shape[-1] // 2
        mu, lv = mulv[:, :Z], mulv[:, Z:]
        z = mu + jnp.exp(0.5 * lv) * eg
        az = jnp.dot(ag.T, z.astype(bf16), preferred_element_type=f32)
        dec = jax.nn.sigmoid(jnp.dot(az.astype(bf16), wd,
                                     preferred_element_type=f32) + params["bd"])
        return dec, mu, lv

    return jax.vmap(one)(origin, adj, eps)


if __name__ == "__main__":
    # B graphs, N nodes, F features, H hidden, Z latent (last dims lane-dense).
    B, N, F, H, Z = 4, 128, 128, 64, 64

    key = jax.random.PRNGKey(0)
    k_x, k_adj, k_eps, k_par = jax.random.split(key, 4)

    origin = jax.random.normal(k_x, (B, N, F), jnp.float32)
    # Dense non-symmetric adjacency so the decoder's transpose matters.
    adj = (jax.random.uniform(k_adj, (B, N, N), jnp.float32) > 0.7).astype(jnp.float32)
    adj = adj / jnp.maximum(adj.sum(axis=-1, keepdims=True), 1.0)  # row-normalize
    eps = jax.random.normal(k_eps, (B, N, Z), jnp.float32)
    params = _init_params(k_par, F, H, Z)

    decode, mu, logvar = trainer_forward(origin, adj, params, eps)
    jax.block_until_ready((decode, mu, logvar))

    dec_ref, mu_ref, lv_ref = _reference(origin, adj, params, eps)
    assert decode.shape == (B, N, F) and mu.shape == (B, N, Z) and logvar.shape == (B, N, Z)
    assert jnp.allclose(decode, dec_ref, atol=1e-2, rtol=1e-2)
    assert jnp.allclose(mu, mu_ref, atol=1e-2, rtol=1e-2)
    assert jnp.allclose(logvar, lv_ref, atol=1e-2, rtol=1e-2)

    print("KERNEL_OK")
</pallas_src>

<mosaic_0001>
module attributes {stable_mosaic.version = 11 : i64} {
  func.func @_vgae_kernel(%arg0: i32, %arg1: memref<1x128x128xbf16, #tpu.memory_space<vmem>>, %arg2: memref<1x128x128xbf16, #tpu.memory_space<vmem>>, %arg3: memref<128x64xbf16, #tpu.memory_space<vmem>>, %arg4: memref<1x64xf32, #tpu.memory_space<vmem>>, %arg5: memref<64x128xbf16, #tpu.memory_space<vmem>>, %arg6: memref<1x128x64xf32, #tpu.memory_space<vmem>>, %arg7: memref<64x128xbf16, #tpu.memory_space<vmem>>, %arg8: memref<1x128xf32, #tpu.memory_space<vmem>>, %arg9: memref<1x128x128xf32, #tpu.memory_space<vmem>>, %arg10: memref<1x128x128xf32, #tpu.memory_space<vmem>>) attributes {dimension_semantics = [#tpu.dimension_semantics<parallel>], iteration_bounds = array<i64: 4>, scalar_prefetch = 0 : i64, scratch_operands = 0 : i64, tpu.core_type = #tpu.core_type<tc>, window_params = [{transform_indices = @transform_0, window_bounds = array<i64: 1, 128, 128>}, {transform_indices = @transform_1, window_bounds = array<i64: 1, 128, 128>}, {pipeline_mode = #tpu.pipeline_mode<synchronous>, transform_indices = @transform_2, window_bounds = array<i64: 128, 64>}, {pipeline_mode = #tpu.pipeline_mode<synchronous>, transform_indices = @transform_3, window_bounds = array<i64: 1, 64>}, {pipeline_mode = #tpu.pipeline_mode<synchronous>, transform_indices = @transform_4, window_bounds = array<i64: 64, 128>}, {transform_indices = @transform_5, window_bounds = array<i64: 1, 128, 64>}, {pipeline_mode = #tpu.pipeline_mode<synchronous>, transform_indices = @transform_6, window_bounds = array<i64: 64, 128>}, {pipeline_mode = #tpu.pipeline_mode<synchronous>, transform_indices = @transform_7, window_bounds = array<i64: 1, 128>}, {transform_indices = @transform_8, window_bounds = array<i64: 1, 128, 128>}, {transform_indices = @transform_9, window_bounds = array<i64: 1, 128, 128>}]} {
    %c0 = arith.constant 0 : index
    %c0_0 = arith.constant 0 : index
    %c0_1 = arith.constant 0 : index
    %0 = vector.load %arg2[%c0, %c0_0, %c0_1] : memref<1x128x128xbf16, #tpu.memory_space<vmem>>, vector<1x128x128xbf16>
    %1 = vector.shape_cast %0 : vector<1x128x128xbf16> to vector<128x128xbf16>
    %c0_2 = arith.constant 0 : index
    %c0_3 = arith.constant 0 : index
    %c0_4 = arith.constant 0 : index
    %2 = vector.load %arg1[%c0_2, %c0_3, %c0_4] : memref<1x128x128xbf16, #tpu.memory_space<vmem>>, vector<1x128x128xbf16>
    %3 = vector.shape_cast %2 : vector<1x128x128xbf16> to vector<128x128xbf16>
    %cst = arith.constant dense<0.000000e+00> : vector<128x128xf32>
    %4 = tpu.matmul %1, %3, %cst {dimension_numbers = #tpu.dot_dimension_numbers<[1], [0], [0], [1], [0, 0, 1, 1], [], []>} : vector<128x128xbf16>, vector<128x128xbf16>, vector<128x128xf32> -> vector<128x128xf32>
    %5 = arith.truncf %4 : vector<128x128xf32> to vector<128x128xbf16>
    %c0_5 = arith.constant 0 : index
    %c0_6 = arith.constant 0 : index
    %6 = vector.load %arg3[%c0_5, %c0_6] : memref<128x64xbf16, #tpu.memory_space<vmem>>, vector<128x64xbf16>
    %cst_7 = arith.constant dense<0.000000e+00> : vector<128x64xf32>
    %7 = tpu.matmul %5, %6, %cst_7 {dimension_numbers = #tpu.dot_dimension_numbers<[1], [0], [0], [1], [0, 0, 1, 1], [], []>} : vector<128x128xbf16>, vector<128x64xbf16>, vector<128x64xf32> -> vector<128x64xf32>
    %c0_8 = arith.constant 0 : index
    %c0_9 = arith.constant 0 : index
    %8 = vector.load %arg4[%c0_8, %c0_9] : memref<1x64xf32, #tpu.memory_space<vmem>>, vector<1x64xf32>
    %9 = vector.broadcast %8 : vector<1x64xf32> to vector<128x64xf32>
    %10 = arith.addf %7, %9 : vector<128x64xf32>
    %cst_10 = arith.constant 0.000000e+00 : f32
    %11 = vector.broadcast %cst_10 : f32 to vector<128x64xf32>
    %12 = arith.maximumf %10, %11 : vector<128x64xf32>
    %13 = arith.truncf %12 : vector<128x64xf32> to vector<128x64xbf16>
    %cst_11 = arith.constant dense<0.000000e+00> : vector<128x64xf32>
    %14 = tpu.matmul %1, %13, %cst_11 {dimension_numbers = #tpu.dot_dimension_numbers<[1], [0], [0], [1], [0, 0, 1, 1], [], []>} : vector<128x128xbf16>, vector<128x64xbf16>, vector<128x64xf32> -> vector<128x64xf32>
    %15 = arith.truncf %14 : vector<128x64xf32> to vector<128x64xbf16>
    %c0_12 = arith.constant 0 : index
    %c0_13 = arith.constant 0 : index
    %16 = vector.load %arg5[%c0_12, %c0_13] : memref<64x128xbf16, #tpu.memory_space<vmem>>, vector<64x128xbf16>
    %cst_14 = arith.constant dense<0.000000e+00> : vector<128x128xf32>
    %17 = tpu.matmul %15, %16, %cst_14 {dimension_numbers = #tpu.dot_dimension_numbers<[1], [0], [0], [1], [0, 0, 1, 1], [], []>} : vector<128x64xbf16>, vector<64x128xbf16>, vector<128x128xf32> -> vector<128x128xf32>
    %18 = vector.extract_strided_slice %17 {offsets = [0, 0], sizes = [128, 64], strides = [1, 1]} : vector<128x128xf32> to vector<128x64xf32>
    %19 = vector.extract_strided_slice %17 {offsets = [0, 64], sizes = [128, 64], strides = [1, 1]} : vector<128x128xf32> to vector<128x64xf32>
    %cst_15 = arith.constant 5.000000e-01 : f32
    %20 = vector.broadcast %cst_15 : f32 to vector<128x64xf32>
    %21 = arith.mulf %20, %19 : vector<128x64xf32>
    %22 = math.exp %21 : vector<128x64xf32>
    %c0_16 = arith.constant 0 : index
    %c0_17 = arith.constant 0 : index
    %c0_18 = arith.constant 0 : index
    %23 = vector.load %arg6[%c0_16, %c0_17, %c0_18] : memref<1x128x64xf32, #tpu.memory_space<vmem>>, vector<1x128x64xf32>
    %24 = vector.shape_cast %23 : vector<1x128x64xf32> to vector<128x64xf32>
    %25 = arith.mulf %22, %24 : vector<128x64xf32>
    %26 = arith.addf %18, %25 : vector<128x64xf32>
    %27 = arith.truncf %26 : vector<128x64xf32> to vector<128x64xbf16>
    %cst_19 = arith.constant dense<0.000000e+00> : vector<128x64xf32>
    %28 = tpu.matmul %1, %27, %cst_19 {dimension_numbers = #tpu.dot_dimension_numbers<[0], [0], [1], [1], [0, 1, 1, 1], [], []>} : vector<128x128xbf16>, vector<128x64xbf16>, vector<128x64xf32> -> vector<128x64xf32>
    %29 = arith.truncf %28 : vector<128x64xf32> to vector<128x64xbf16>
    %c0_20 = arith.constant 0 : index
    %c0_21 = arith.constant 0 : index
    %30 = vector.load %arg7[%c0_20, %c0_21] : memref<64x128xbf16, #tpu.memory_space<vmem>>, vector<64x128xbf16>
    %cst_22 = arith.constant dense<0.000000e+00> : vector<128x128xf32>
    %31 = tpu.matmul %29, %30, %cst_22 {dimension_numbers = #tpu.dot_dimension_numbers<[1], [0], [0], [1], [0, 0, 1, 1], [], []>} : vector<128x64xbf16>, vector<64x128xbf16>, vector<128x128xf32> -> vector<128x128xf32>
    %c0_23 = arith.constant 0 : index
    %c0_24 = arith.constant 0 : index
    %32 = vector.load %arg8[%c0_23, %c0_24] : memref<1x128xf32, #tpu.memory_space<vmem>>, vector<1x128xf32>
    %33 = vector.broadcast %32 : vector<1x128xf32> to vector<128x128xf32>
    %34 = arith.addf %31, %33 : vector<128x128xf32>
    %35 = arith.negf %34 : vector<128x128xf32>
    %36 = math.exp %35 : vector<128x128xf32>
    %cst_25 = arith.constant 1.000000e+00 : f32
    %37 = vector.broadcast %cst_25 : f32 to vector<128x128xf32>
    %38 = arith.addf %37, %36 : vector<128x128xf32>
    %39 = arith.divf %37, %38 : vector<128x128xf32>
    %c0_26 = arith.constant 0 : index
    %c0_27 = arith.constant 0 : index
    %c0_28 = arith.constant 0 : index
    %40 = vector.load %arg9[%c0_26, %c0_27, %c0_28] : memref<1x128x128xf32, #tpu.memory_space<vmem>>, vector<1x128x128xf32>
    %41 = vector.shape_cast %40 : vector<1x128x128xf32> to vector<128x128xf32>
    %42 = vector.shape_cast %39 : vector<128x128xf32> to vector<1x128x128xf32>
    tpu.vector_store %arg9[%c0_26, %c0_27, %c0_28], %42 {strides = array<i32>} : memref<1x128x128xf32, #tpu.memory_space<vmem>>, vector<1x128x128xf32>,
    %c0_29 = arith.constant 0 : index
    %c0_30 = arith.constant 0 : index
    %c0_31 = arith.constant 0 : index
    %43 = vector.load %arg10[%c0_29, %c0_30, %c0_31] : memref<1x128x128xf32, #tpu.memory_space<vmem>>, vector<1x128x128xf32>
    %44 = vector.shape_cast %43 : vector<1x128x128xf32> to vector<128x128xf32>
    %45 = vector.shape_cast %17 : vector<128x128xf32> to vector<1x128x128xf32>
    tpu.vector_store %arg10[%c0_29, %c0_30, %c0_31], %45 {strides = array<i32>} : memref<1x128x128xf32, #tpu.memory_space<vmem>>, vector<1x128x128xf32>,
    return
  }
  func.func @transform_0(%arg0: i32) -> (i32, i32, i32) {
    %c0_i32 = arith.constant 0 : i32
    %c0_i32_0 = arith.constant 0 : i32
    %c0_i32_1 = arith.constant 0 : i32
    return %arg0, %c0_i32, %c0_i32_0 : i32, i32, i32
  }
  func.func @transform_1(%arg0: i32) -> (i32, i32, i32) {
    %c0_i32 = arith.constant 0 : i32
    %c0_i32_0 = arith.constant 0 : i32
    %c0_i32_1 = arith.constant 0 : i32
    return %arg0, %c0_i32, %c0_i32_0 : i32, i32, i32
  }
  func.func @transform_2(%arg0: i32) -> (i32, i32) {
    %c0_i32 = arith.constant 0 : i32
    %c0_i32_0 = arith.constant 0 : i32
    %c0_i32_1 = arith.constant 0 : i32
    return %c0_i32, %c0_i32_0 : i32, i32
  }
  func.func @transform_3(%arg0: i32) -> (i32, i32) {
    %c0_i32 = arith.constant 0 : i32
    %c0_i32_0 = arith.constant 0 : i32
    %c0_i32_1 = arith.constant 0 : i32
    return %c0_i32, %c0_i32_0 : i32, i32
  }
  func.func @transform_4(%arg0: i32) -> (i32, i32) {
    %c0_i32 = arith.constant 0 : i32
    %c0_i32_0 = arith.constant 0 : i32
    %c0_i32_1 = arith.constant 0 : i32
    return %c0_i32, %c0_i32_0 : i32, i32
  }
  func.func @transform_5(%arg0: i32) -> (i32, i32, i32) {
    %c0_i32 = arith.constant 0 : i32
    %c0_i32_0 = arith.constant 0 : i32
    %c0_i32_1 = arith.constant 0 : i32
    return %arg0, %c0_i32, %c0_i32_0 : i32, i32, i32
  }
  func.func @transform_6(%arg0: i32) -> (i32, i32) {
    %c0_i32 = arith.constant 0 : i32
    %c0_i32_0 = arith.constant 0 : i32
    %c0_i32_1 = arith.constant 0 : i32
    return %c0_i32, %c0_i32_0 : i32, i32
  }
  func.func @transform_7(%arg0: i32) -> (i32, i32) {
    %c0_i32 = arith.constant 0 : i32
    %c0_i32_0 = arith.constant 0 : i32
    %c0_i32_1 = arith.constant 0 : i32
    return %c0_i32, %c0_i32_0 : i32, i32
  }
  func.func @transform_8(%arg0: i32) -> (i32, i32, i32) {
    %c0_i32 = arith.constant 0 : i32
    %c0_i32_0 = arith.constant 0 : i32
    %c0_i32_1 = arith.constant 0 : i32
    return %arg0, %c0_i32, %c0_i32_0 : i32, i32, i32
  }
  func.func @transform_9(%arg0: i32) -> (i32, i32, i32) {
    %c0_i32 = arith.constant 0 : i32
    %c0_i32_0 = arith.constant 0 : i32
    %c0_i32_1 = arith.constant 0 : i32
    return %arg0, %c0_i32, %c0_i32_0 : i32, i32, i32
  }
}

</mosaic_0001>

<llo_original>
// kernel: tpu_custom_call.1
$region0: #{tpu_custom_call.1}
  #allocation0 [shape = 'u32[]', space=smem, size = 0x4, offset = 0x4, fixed_abs, tag = 'smem constant byte address 0x4 - core index']
  #allocation1 [shape = 'u32[144,128]{1,0:T(1,128)}', space=vmem, size = 0x12000, scoped, tag = 'internal scratch']
  %s0 = inlined_call_operand.vmem [shape: bf16[4,128,128], index: 0, kind: input, shape index: {}]
  %s1 = inlined_call_operand.vmem [shape: bf16[4,128,128], index: 1, kind: input, shape index: {}]
  %s2 = inlined_call_operand.vmem [shape: bf16[128,64], index: 2, kind: input, shape index: {}]
  %s3 = inlined_call_operand.vmem [shape: f32[1,64], index: 3, kind: input, shape index: {}]
  %s4 = inlined_call_operand.vmem [shape: bf16[64,128], index: 4, kind: input, shape index: {}]
  %s5 = inlined_call_operand.vmem [shape: f32[4,128,64], index: 5, kind: input, shape index: {}]
  %s6 = inlined_call_operand.vmem [shape: bf16[64,128], index: 6, kind: input, shape index: {}]
  %s7 = inlined_call_operand.vmem [shape: f32[1,128], index: 7, kind: input, shape index: {}]
  %s8 = inlined_call_operand.hbm [shape: f32[4,128,128], index: 8, kind: output, shape index: {0}]
  %s9 = inlined_call_operand.hbm [shape: f32[4,128,128], index: 9, kind: output, shape index: {1}]
  %10 = xla_tuple %s8, %s9
  %s11 = sld [smem:[#allocation0]]
  $region73: #{tpu_custom_call.1} parent=0
    _
  %s13 = ssub.s32 1, %s11
  %s14 = scalar_select 0, %s13, %s11
  $region1: #{tpu_custom_call.1} parent=0
    #allocation2 [shape = 'u8[131072]{0}', space=vmem, size = 0x20000, scoped, tag = 'output window, operand 0']
    #allocation3 [shape = 's32[2]{0}', space=sflag, size = 0x8, scoped, tag = 'scoped memory for tpu_custom_call.1']
    #allocation4 [shape = 'u8[131072]{0}', space=vmem, size = 0x20000, scoped, tag = 'output window, operand 1']
    #allocation5 [shape = 's32[2]{0}', space=sflag, size = 0x8, scoped, tag = 'scoped memory for tpu_custom_call.1']
    %15 = vsyncpa [#allocation3], 0
    %s16 = scalar_lea.sflag [#allocation3], 1
    %17 = vsyncpa %s16, 0
    %18 = vsyncpa [#allocation5], 0
    %s19 = scalar_lea.sflag [#allocation5], 1
    %20 = vsyncpa %s19, 0
    loop: start=0, step=1, limit=6
    $region2: #{tpu_custom_call.1} parent=1 // loop_pre_header
      _
    $region3: #{tpu_custom_call.1} parent=1 // loop_header
      %s22 = sphi 0, %s26
      %p23 = scmp.ge.s32.totalorder %s22, 6
      %s32 = sphi 0, %s34
      %s35 = sphi 0, %s32
      %s36 = sphi 0, %s35
      %s52 = sphi 0, %s36
      %s58 = sphi 0, %s60
      %s61 = sphi 0, %s58
      %s62 = sphi 0, %s61
      %s78 = sphi 0, %s62
      %s82 = sphi 0, %s82
      %s84 = sphi 0, %s82
      %s85 = sphi 0, %s84
      %s99 = sphi 0, %s85
      %s103 = sphi 0, %s103
      %s105 = sphi 0, %s103
      %s106 = sphi 0, %s105
      %s120 = sphi 0, %s106
      %s124 = sphi 0, %s124
      %s126 = sphi 0, %s124
      %s127 = sphi 0, %s126
      %s141 = sphi 0, %s127
      %s147 = sphi 0, %s149
      %s150 = sphi 0, %s147
      %s151 = sphi 0, %s150
      %s167 = sphi 0, %s151
      %s171 = sphi 0, %s171
      %s173 = sphi 0, %s171
      %s174 = sphi 0, %s173
      %s188 = sphi 0, %s174
      %s192 = sphi 0, %s192
      %s194 = sphi 0, %s192
      %s195 = sphi 0, %s194
      %s209 = sphi 0, %s195
      %s215 = sphi 0, %s217
      %s218 = sphi 0, %s215
      %s219 = sphi 0, %s218
      %s235 = sphi 0, %s219
      %s241 = sphi 0, %s243
      %s244 = sphi 0, %s241
      %s245 = sphi 0, %s244
      %s261 = sphi 0, %s245
    $region4: #{tpu_custom_call.1} parent=1 // loop_header_branch
      %25 = sbr.rel (%p23) target = $region8
    $region5: #{tpu_custom_call.1} parent=1 // loop_body
      %s27 = ssub.s32 %s22, 1
      %s28 = ssub.s32 %s22, 2
      %s29 = sadd.s32 %s22, 1
      %s30 = ssub.s32 %s22, %s29
      %p31 = scmp.eq.s32.totalorder %s30, 0
      %s33 = sadd.s32 %s32, 1
      %s34 = scalar_select %p31, %s32, %s33
      %p37 = pneg %p31
      %p38 = scmp.eq.s32.totalorder %s22, 3
      %p39 = por %p37, %p38
      %p40 = scmp.ne.s32.totalorder %s32, %s35
      %p41 = scmp.eq.s32.totalorder %s22, 0
      %p42 = por %p40, %p41
      %p43 = scmp.ne.s32.totalorder %s32, %s35
      %p44 = scmp.eq.s32.totalorder %s27, 3
      %p45 = por %p43, %p44
      %p46 = scmp.ne.s32.totalorder %s35, %s36
      %p47 = scmp.eq.s32.totalorder %s27, 0
      %p48 = por %p46, %p47
      %p49 = scmp.ne.s32.totalorder %s35, %s36
      %p50 = scmp.eq.s32.totalorder %s28, 3
      %p51 = por %p49, %p50
      %p53 = scmp.ne.s32.totalorder %s36, %s52
      %p54 = scmp.eq.s32.totalorder %s28, 0
      %p55 = por %p53, %p54
      %s56 = ssub.s32 %s22, %s29
      %p57 = scmp.eq.s32.totalorder %s56, 0
      %s59 = sadd.s32 %s58, 1
      %s60 = scalar_select %p57, %s58, %s59
      %p63 = pneg %p57
      %p64 = scmp.eq.s32.totalorder %s22, 3
      %p65 = por %p63, %p64
      %p66 = scmp.ne.s32.totalorder %s58, %s61
      %p67 = scmp.eq.s32.totalorder %s22, 0
      %p68 = por %p66, %p67
      %p69 = scmp.ne.s32.totalorder %s58, %s61
      %p70 = scmp.eq.s32.totalorder %s27, 3
      %p71 = por %p69, %p70
      %p72 = scmp.ne.s32.totalorder %s61, %s62
      %p73 = scmp.eq.s32.totalorder %s27, 0
      %p74 = por %p72, %p73
      %p75 = scmp.ne.s32.totalorder %s61, %s62
      %p76 = scmp.eq.s32.totalorder %s28, 3
      %p77 = por %p75, %p76
      %p79 = scmp.ne.s32.totalorder %s62, %s78
      %p80 = scmp.eq.s32.totalorder %s28, 0
      %p81 = por %p79, %p80
      %s83 = sadd.s32 %s82, 1
      %p86 = scmp.eq.s32.totalorder %s22, 3
      %p87 = scmp.ne.s32.totalorder %s82, %s84
      %p88 = scmp.eq.s32.totalorder %s22, 0
      %p89 = por %p87, %p88
      %p90 = scmp.ne.s32.totalorder %s82, %s84
      %p91 = scmp.eq.s32.totalorder %s27, 3
      %p92 = por %p90, %p91
      %p93 = scmp.ne.s32.totalorder %s84, %s85
      %p94 = scmp.eq.s32.totalorder %s27, 0
      %p95 = por %p93, %p94
      %p96 = scmp.ne.s32.totalorder %s84, %s85
      %p97 = scmp.eq.s32.totalorder %s28, 3
      %p98 = por %p96, %p97
      %p100 = scmp.ne.s32.totalorder %s85, %s99
      %p101 = scmp.eq.s32.totalorder %s28, 0
      %p102 = por %p100, %p101
      %s104 = sadd.s32 %s103, 1
      %p107 = scmp.eq.s32.totalorder %s22, 3
      %p108 = scmp.ne.s32.totalorder %s103, %s105
      %p109 = scmp.eq.s32.totalorder %s22, 0
      %p110 = por %p108, %p109
      %p111 = scmp.ne.s32.totalorder %s103, %s105
      %p112 = scmp.eq.s32.totalorder %s27, 3
      %p113 = por %p111, %p112
      %p114 = scmp.ne.s32.totalorder %s105, %s106
      %p115 = scmp.eq.s32.totalorder %s27, 0
      %p116 = por %p114, %p115
      %p117 = scmp.ne.s32.totalorder %s105, %s106
      %p118 = scmp.eq.s32.totalorder %s28, 3
      %p119 = por %p117, %p118
      %p121 = scmp.ne.s32.totalorder %s106, %s120
      %p122 = scmp.eq.s32.totalorder %s28, 0
      %p123 = por %p121, %p122
      %s125 = sadd.s32 %s124, 1
      %p128 = scmp.eq.s32.totalorder %s22, 3
      %p129 = scmp.ne.s32.totalorder %s124, %s126
      %p130 = scmp.eq.s32.totalorder %s22, 0
      %p131 = por %p129, %p130
      %p132 = scmp.ne.s32.totalorder %s124, %s126
      %p133 = scmp.eq.s32.totalorder %s27, 3
      %p134 = por %p132, %p133
      %p135 = scmp.ne.s32.totalorder %s126, %s127
      %p136 = scmp.eq.s32.totalorder %s27, 0
      %p137 = por %p135, %p136
      %p138 = scmp.ne.s32.totalorder %s126, %s127
      %p139 = scmp.eq.s32.totalorder %s28, 3
      %p140 = por %p138, %p139
      %p142 = scmp.ne.s32.totalorder %s127, %s141
      %p143 = scmp.eq.s32.totalorder %s28, 0
      %p144 = por %p142, %p143
      %s145 = ssub.s32 %s22, %s29
      %p146 = scmp.eq.s32.totalorder %s145, 0
      %s148 = sadd.s32 %s147, 1
      %s149 = scalar_select %p146, %s147, %s148
      %p152 = pneg %p146
      %p153 = scmp.eq.s32.totalorder %s22, 3
      %p154 = por %p152, %p153
      %p155 = scmp.ne.s32.totalorder %s147, %s150
      %p156 = scmp.eq.s32.totalorder %s22, 0
      %p157 = por %p155, %p156
      %p158 = scmp.ne.s32.totalorder %s147, %s150
      %p159 = scmp.eq.s32.totalorder %s27, 3
      %p160 = por %p158, %p159
      %p161 = scmp.ne.s32.totalorder %s150, %s151
      %p162 = scmp.eq.s32.totalorder %s27, 0
      %p163 = por %p161, %p162
      %p164 = scmp.ne.s32.totalorder %s150, %s151
      %p165 = scmp.eq.s32.totalorder %s28, 3
      %p166 = por %p164, %p165
      %p168 = scmp.ne.s32.totalorder %s151, %s167
      %p169 = scmp.eq.s32.totalorder %s28, 0
      %p170 = por %p168, %p169
      %s172 = sadd.s32 %s171, 1
      %p175 = scmp.eq.s32.totalorder %s22, 3
      %p176 = scmp.ne.s32.totalorder %s171, %s173
      %p177 = scmp.eq.s32.totalorder %s22, 0
      %p178 = por %p176, %p177
      %p179 = scmp.ne.s32.totalorder %s171, %s173
      %p180 = scmp.eq.s32.totalorder %s27, 3
      %p181 = por %p179, %p180
      %p182 = scmp.ne.s32.totalorder %s173, %s174
      %p183 = scmp.eq.s32.totalorder %s27, 0
      %p184 = por %p182, %p183
      %p185 = scmp.ne.s32.totalorder %s173, %s174
      %p186 = scmp.eq.s32.totalorder %s28, 3
      %p187 = por %p185, %p186
      %p189 = scmp.ne.s32.totalorder %s174, %s188
      %p190 = scmp.eq.s32.totalorder %s28, 0
      %p191 = por %p189, %p190
      %s193 = sadd.s32 %s192, 1
      %p196 = scmp.eq.s32.totalorder %s22, 3
      %p197 = scmp.ne.s32.totalorder %s192, %s194
      %p198 = scmp.eq.s32.totalorder %s22, 0
      %p199 = por %p197, %p198
      %p200 = scmp.ne.s32.totalorder %s192, %s194
      %p201 = scmp.eq.s32.totalorder %s27, 3
      %p202 = por %p200, %p201
      %p203 = scmp.ne.s32.totalorder %s194, %s195
      %p204 = scmp.eq.s32.totalorder %s27, 0
      %p205 = por %p203, %p204
      %p206 = scmp.ne.s32.totalorder %s194, %s195
      %p207 = scmp.eq.s32.totalorder %s28, 3
      %p208 = por %p206, %p207
      %p210 = scmp.ne.s32.totalorder %s195, %s209
      %p211 = scmp.eq.s32.totalorder %s28, 0
      %p212 = por %p210, %p211
      %s213 = ssub.s32 %s22, %s29
      %p214 = scmp.eq.s32.totalorder %s213, 0
      %s216 = sadd.s32 %s215, 1
      %s217 = scalar_select %p214, %s215, %s216
      %p220 = pneg %p214
      %p221 = scmp.eq.s32.totalorder %s22, 3
      %p222 = por %p220, %p221
      %p223 = scmp.ne.s32.totalorder %s215, %s218
      %p224 = scmp.eq.s32.totalorder %s22, 0
      %p225 = por %p223, %p224
      %p226 = scmp.ne.s32.totalorder %s215, %s218
      %p227 = scmp.eq.s32.totalorder %s27, 3
      %p228 = por %p226, %p227
      %p229 = scmp.ne.s32.totalorder %s218, %s219
      %p230 = scmp.eq.s32.totalorder %s27, 0
      %p231 = por %p229, %p230
      %p232 = scmp.ne.s32.totalorder %s218, %s219
      %p233 = scmp.eq.s32.totalorder %s28, 3
      %p234 = por %p232, %p233
      %p236 = scmp.ne.s32.totalorder %s219, %s235
      %p237 = scmp.eq.s32.totalorder %s28, 0
      %p238 = por %p236, %p237
      %s239 = ssub.s32 %s22, %s29
      %p240 = scmp.eq.s32.totalorder %s239, 0
      %s242 = sadd.s32 %s241, 1
      %s243 = scalar_select %p240, %s241, %s242
      %p246 = pneg %p240
      %p247 = scmp.eq.s32.totalorder %s22, 3
      %p248 = por %p246, %p247
      %p249 = scmp.ne.s32.totalorder %s241, %s244
      %p250 = scmp.eq.s32.totalorder %s22, 0
      %p251 = por %p249, %p250
      %p252 = scmp.ne.s32.totalorder %s241, %s244
      %p253 = scmp.eq.s32.totalorder %s27, 3
      %p254 = por %p252, %p253
      %p255 = scmp.ne.s32.totalorder %s244, %s245
      %p256 = scmp.eq.s32.totalorder %s27, 0
      %p257 = por %p255, %p256
      %p258 = scmp.ne.s32.totalorder %s244, %s245
      %p259 = scmp.eq.s32.totalorder %s28, 3
      %p260 = por %p258, %p259
      %p262 = scmp.ne.s32.totalorder %s245, %s261
      %p263 = scmp.eq.s32.totalorder %s28, 0
      %p264 = por %p262, %p263
      %p265 = scmp.le.s32.totalorder 1, %s22
      %p266 = scmp.lt.s32.totalorder %s22, 5
      %p267 = pnand %p265, %p266
      %p268 = pneg %p267
      // Predicated region
      $region9: #{tpu_custom_call.1} parent=5 // pred_check
        _
      $region10: #{tpu_custom_call.1} parent=5 // pred_check_branch
        %270 = sbr.rel (%p267) target = $region12
      $region11: #{tpu_custom_call.1} parent=5 // pred_region
        %s271 = ssub.s32 %s22, 1
        // Predicated region
        $region13: #{tpu_custom_call.1} parent=11 // pred_check
          %p272 = pneg %p95
        $region14: #{tpu_custom_call.1} parent=11 // pred_check_branch
          %274 = sbr.rel (%p272) target = $region16
        $region15: #{tpu_custom_call.1} parent=11 // pred_region
          _
        $region16: #{tpu_custom_call.1} parent=11 // pred_fallthru
          _
        // Predicated region
        $region17: #{tpu_custom_call.1} parent=11 // pred_check
          %p275 = pneg %p116
        $region18: #{tpu_custom_call.1} parent=11 // pred_check_branch
          %277 = sbr.rel (%p275) target = $region20
        $region19: #{tpu_custom_call.1} parent=11 // pred_region
          _
        $region20: #{tpu_custom_call.1} parent=11 // pred_fallthru
          _
        // Predicated region
        $region21: #{tpu_custom_call.1} parent=11 // pred_check
          %p278 = pneg %p137
        $region22: #{tpu_custom_call.1} parent=11 // pred_check_branch
          %280 = sbr.rel (%p278) target = $region24
        $region23: #{tpu_custom_call.1} parent=11 // pred_region
          _
        $region24: #{tpu_custom_call.1} parent=11 // pred_fallthru
          _
        // Predicated region
        $region25: #{tpu_custom_call.1} parent=11 // pred_check
          %p281 = pneg %p184
        $region26: #{tpu_custom_call.1} parent=11 // pred_check_branch
          %283 = sbr.rel (%p281) target = $region28
        $region27: #{tpu_custom_call.1} parent=11 // pred_region
          _
        $region28: #{tpu_custom_call.1} parent=11 // pred_fallthru
          _
        // Predicated region
        $region29: #{tpu_custom_call.1} parent=11 // pred_check
          %p284 = pneg %p205
        $region30: #{tpu_custom_call.1} parent=11 // pred_check_branch
          %286 = sbr.rel (%p284) target = $region32
        $region31: #{tpu_custom_call.1} parent=11 // pred_region
          _
        $region32: #{tpu_custom_call.1} parent=11 // pred_fallthru
          _
      $region12: #{tpu_custom_call.1} parent=5 // pred_fallthru
        _
      %p287 = scmp.lt.s32.totalorder %s22, 4
      // Predicated region
      $region33: #{tpu_custom_call.1} parent=5 // pred_check
        %p288 = pneg %p287
      $region34: #{tpu_custom_call.1} parent=5 // pred_check_branch
        %290 = sbr.rel (%p288) target = $region36
      $region35: #{tpu_custom_call.1} parent=5 // pred_region
        // Predicated region
        $region37: #{tpu_custom_call.1} parent=35 // pred_check
          %p291 = pneg %p42
        $region38: #{tpu_custom_call.1} parent=35 // pred_check_branch
          %293 = sbr.rel (%p291) target = $region40
        $region39: #{tpu_custom_call.1} parent=35 // pred_region
          %p294 = scmp.lt.s32.totalorder %s22, 3
          %s295 = scalar_select %p294, %s22, 3
          %s296 = smul.addr %s295, 16
          %s297 = smul.addr %s296, 4
          %s298 = scalar_lea.vmem %s0, %s297
        $region40: #{tpu_custom_call.1} parent=35 // pred_fallthru
          _
        // Predicated region
        $region41: #{tpu_custom_call.1} parent=35 // pred_check
          %p299 = pneg %p68
        $region42: #{tpu_custom_call.1} parent=35 // pred_check_branch
          %301 = sbr.rel (%p299) target = $region44
        $region43: #{tpu_custom_call.1} parent=35 // pred_region
          %p302 = scmp.lt.s32.totalorder %s22, 3
          %s303 = scalar_select %p302, %s22, 3
          %s304 = smul.addr %s303, 16
          %s305 = smul.addr %s304, 4
          %s306 = scalar_lea.vmem %s1, %s305
        $region44: #{tpu_custom_call.1} parent=35 // pred_fallthru
          _
        // Predicated region
        $region45: #{tpu_custom_call.1} parent=35 // pred_check
          %p307 = pneg %p157
        $region46: #{tpu_custom_call.1} parent=35 // pred_check_branch
          %309 = sbr.rel (%p307) target = $region48
        $region47: #{tpu_custom_call.1} parent=35 // pred_region
          %p310 = scmp.lt.s32.totalorder %s22, 3
          %s311 = scalar_select %p310, %s22, 3
          %s312 = smul.addr %s311, 16
          %s313 = smul.addr %s312, 8
          %s314 = scalar_lea.vmem %s5, %s313
        $region48: #{tpu_custom_call.1} parent=35 // pred_fallthru
          _
      $region36: #{tpu_custom_call.1} parent=5 // pred_fallthru
        _
      %p315 = scmp.le.s32.totalorder 1, %s22
      %p316 = scmp.lt.s32.totalorder %s22, 5
      %p317 = pnand %p315, %p316
      %p318 = pneg %p317
      // Predicated region
      $region49: #{tpu_custom_call.1} parent=5 // pred_check
        _
      $region50: #{tpu_custom_call.1} parent=5 // pred_check_branch
        %320 = sbr.rel (%p317) target = $region52
      $region51: #{tpu_custom_call.1} parent=5 // pred_region
        %s321 = ssub.s32 %s22, 1
        %p322 = scmp.lt.s32.totalorder %s27, 3
        %s323 = scalar_select %p322, %s27, 3
        %s324 = smul.addr %s323, 16
        %s325 = smul.addr %s324, 4
        %s326 = scalar_lea.vmem %s0, %s325
        %p327 = pneg %p48
        %p328 = pneg %p45
        %p329 = scmp.lt.s32.totalorder %s27, 3
        %s330 = scalar_select %p329, %s27, 3
        %s331 = smul.addr %s330, 16
        %s332 = smul.addr %s331, 4
        %s333 = scalar_lea.vmem %s1, %s332
        %p334 = pneg %p74
        %p335 = pneg %p71
        %p336 = pneg %p95
        %p337 = pneg %p92
        %p338 = pneg %p116
        %p339 = pneg %p113
        %p340 = pneg %p137
        %p341 = pneg %p134
        %p342 = scmp.lt.s32.totalorder %s27, 3
        %s343 = scalar_select %p342, %s27, 3
        %s344 = smul.addr %s343, 16
        %s345 = smul.addr %s344, 8
        %s346 = scalar_lea.vmem %s5, %s345
        %p347 = pneg %p163
        %p348 = pneg %p160
        %p349 = pneg %p184
        %p350 = pneg %p181
        %p351 = pneg %p205
        %p352 = pneg %p202
        %p353 = pneg %p231
        %p354 = pneg %p228
        %s355 = sand.u32 %s218, 1
        %s356 = scalar_lea.sflag [#allocation3], %s355
        %s357 = sand.u32 %s218, 1
        %s358 = smul.addr %s357, 128
        %s359 = scalar_lea.vmem [#allocation2], %s358
        %p360 = pneg %p257
        %p361 = pneg %p254
        %s362 = sand.u32 %s244, 1
        %s363 = scalar_lea.sflag [#allocation5], %s362
        %s364 = sand.u32 %s244, 1
        %s365 = smul.addr %s364, 128
        %s366 = scalar_lea.vmem [#allocation4], %s365
        %p367 = scmp.lt.s32.totalorder %s27, 3
        %s368 = scalar_select %p367, %s27, 3
        %s369 = smul.addr %s368, 16
        %s370 = smul.addr %s369, 4
        %s371 = scalar_lea.vmem %s0, %s370
        %p372 = scmp.lt.s32.totalorder %s27, 3
        %s373 = scalar_select %p372, %s27, 3
        %s374 = smul.addr %s373, 16
        %s375 = smul.addr %s374, 4
        %s376 = scalar_lea.vmem %s1, %s375
        %p377 = scmp.lt.s32.totalorder %s27, 3
        %s378 = scalar_select %p377, %s27, 3
        %s379 = smul.addr %s378, 16
        %s380 = smul.addr %s379, 8
        %s381 = scalar_lea.vmem %s5, %s380
        %v383 = vld [vmem:[%s376] sm:$0xf]
        %v384 = vld [vmem:[%s376 + $0x4] sm:$0xf]
        %v385 = vld [vmem:[%s376 + $0x8] sm:$0xf]
        %v386 = vld [vmem:[%s376 + $0xc] sm:$0xf]
        %v387 = vld [vmem:[%s376 + $0x10] sm:$0xf]
        %v388 = vld [vmem:[%s376 + $0x14] sm:$0xf]
        %v389 = vld [vmem:[%s376 + $0x18] sm:$0xf]
        %v390 = vld [vmem:[%s376 + $0x1c] sm:$0xf]
        %v391 = vld [vmem:[%s376 + $0x20] sm:$0xf]
        %v392 = vld [vmem:[%s376 + $0x24] sm:$0xf]
        %v393 = vld [vmem:[%s376 + $0x28] sm:$0xf]
        %v394 = vld [vmem:[%s376 + $0x2c] sm:$0xf]
        %v395 = vld [vmem:[%s376 + $0x30] sm:$0xf]
        %v396 = vld [vmem:[%s376 + $0x34] sm:$0xf]
        %v397 = vld [vmem:[%s376 + $0x38] sm:$0xf]
        %v398 = vld [vmem:[%s376 + $0x3c] sm:$0xf]
        %v399 = vld [vmem:[%s371] sm:$0xf]
        %v400 = vld [vmem:[%s371 + $0x4] sm:$0xf]
        %v401 = vld [vmem:[%s371 + $0x8] sm:$0xf]
        %v402 = vld [vmem:[%s371 + $0xc] sm:$0xf]
        %v403 = vld [vmem:[%s371 + $0x10] sm:$0xf]
        %v404 = vld [vmem:[%s371 + $0x14] sm:$0xf]
        %v405 = vld [vmem:[%s371 + $0x18] sm:$0xf]
        %v406 = vld [vmem:[%s371 + $0x1c] sm:$0xf]
        %v407 = vld [vmem:[%s371 + $0x20] sm:$0xf]
        %v408 = vld [vmem:[%s371 + $0x24] sm:$0xf]
        %v409 = vld [vmem:[%s371 + $0x28] sm:$0xf]
        %v410 = vld [vmem:[%s371 + $0x2c] sm:$0xf]
        %v411 = vld [vmem:[%s371 + $0x30] sm:$0xf]
        %v412 = vld [vmem:[%s371 + $0x34] sm:$0xf]
        %v413 = vld [vmem:[%s371 + $0x38] sm:$0xf]
        %v414 = vld [vmem:[%s371 + $0x3c] sm:$0xf]
        %v431 = vunpack.c.l.b16 %v383
        %v432 = vunpack.c.l.b16 %v384
        %v433 = vunpack.c.l.b16 %v385
        %v434 = vunpack.c.l.b16 %v386
        %v435 = vunpack.c.l.b16 %v387
        %v436 = vunpack.c.l.b16 %v388
        %v437 = vunpack.c.l.b16 %v389
        %v438 = vunpack.c.l.b16 %v390
        %v439 = vunpack.c.l.b16 %v391
        %v440 = vunpack.c.l.b16 %v392
        %v441 = vunpack.c.l.b16 %v393
        %v442 = vunpack.c.l.b16 %v394
        %v443 = vunpack.c.l.b16 %v395
        %v444 = vunpack.c.l.b16 %v396
        %v445 = vunpack.c.l.b16 %v397
        %v446 = vunpack.c.l.b16 %v398
        %v447 = vpack.c.b16 %v432, %v431
        %v448 = vpack.c.b16 %v434, %v433
        %v449 = vpack.c.b16 %v436, %v435
        %v450 = vpack.c.b16 %v438, %v437
        %v451 = vpack.c.b16 %v440, %v439
        %v452 = vpack.c.b16 %v442, %v441
        %v453 = vpack.c.b16 %v444, %v443
        %v454 = vpack.c.b16 %v446, %v445
        %v479 = vunpack.c.l.b16 %v399
        %v480 = vunpack.c.l.b16 %v400
        %v481 = vunpack.c.l.b16 %v401
        %v482 = vunpack.c.l.b16 %v402
        %v483 = vunpack.c.l.b16 %v403
        %v484 = vunpack.c.l.b16 %v404
        %v485 = vunpack.c.l.b16 %v405
        %v486 = vunpack.c.l.b16 %v406
        %v487 = vunpack.c.l.b16 %v407
        %v488 = vunpack.c.l.b16 %v408
        %v489 = vunpack.c.l.b16 %v409
        %v490 = vunpack.c.l.b16 %v410
        %v491 = vunpack.c.l.b16 %v411
        %v492 = vunpack.c.l.b16 %v412
        %v493 = vunpack.c.l.b16 %v413
        %v494 = vunpack.c.l.b16 %v414
        %v495 = vpack.c.b16 %v480, %v479
        %v496 = vpack.c.b16 %v482, %v481
        %v497 = vpack.c.b16 %v484, %v483
        %v498 = vpack.c.b16 %v486, %v485
        %v499 = vpack.c.b16 %v488, %v487
        %v500 = vpack.c.b16 %v490, %v489
        %v501 = vpack.c.b16 %v492, %v491
        %v502 = vpack.c.b16 %v494, %v493
        %511 = vmatprep.subr.bf16.mxu0 0
        %512 = vmatpush1.bf16.msra.mxu0 %v495
        %513 = vmatprep.subr.bf16.mxu0 0
        %514 = vmatpush1.bf16.msra.mxu0 %v496
        %515 = vmatprep.subr.bf16.mxu0 0
        %516 = vmatpush1.bf16.msra.mxu0 %v497
        %517 = vmatprep.subr.bf16.mxu0 0
        %518 = vmatpush1.bf16.msra.mxu0 %v498
        %519 = vmatprep.subr.bf16.mxu0 0
        %520 = vmatpush1.bf16.msra.mxu0 %v499
        %521 = vmatprep.subr.bf16.mxu0 0
        %522 = vmatpush1.bf16.msra.mxu0 %v500
        %523 = vmatprep.subr.bf16.mxu0 0
        %524 = vmatpush1.bf16.msra.mxu0 %v501
        %525 = vmatprep.subr.bf16.mxu0 0
        %526 = vmatpush1.bf16.msra.mxu0 %v502
        %527 = vmatprep.subr.bf16.mxu0 0
        %528 = vmatpush1.bf16.msra.mxu0 0
        %529 = vmatprep.subr.bf16.mxu0 0
        %530 = vmatpush1.bf16.msra.mxu0 0
        %531 = vmatprep.subr.bf16.mxu0 0
        %532 = vmatpush1.bf16.msra.mxu0 0
        %533 = vmatprep.subr.bf16.mxu0 0
        %534 = vmatpush1.bf16.msra.mxu0 0
        %535 = vmatprep.subr.bf16.mxu0 0
        %536 = vmatpush1.bf16.msra.mxu0 0
        %537 = vmatprep.subr.bf16.mxu0 0
        %538 = vmatpush1.bf16.msra.mxu0 0
        %539 = vmatprep.subr.bf16.mxu0 0
        %540 = vmatpush1.bf16.msra.mxu0 0
        %541 = vmatprep.subr.bf16.mxu0 0
        %542 = vmatpush1.bf16.msra.mxu0 0
        %543 = vmatprep.mubr.bf16.mxu0 0
        %544 = vmatmul.mubr.bf16.gmra.mrb[0].mxu0 %v447
        %v545 = vpop.f32.mrb[0].mxu0
        %v546 = vadd.f32 0.0, %v545
        %v547 = vpop.f32.mrb[0].mxu0
        %v548 = vpop.f32.mrb[0].mxu0
        %v549 = vadd.f32 0.0, %v548
        %v550 = vpop.f32.mrb[0].mxu0
        %551 = vmatprep.mubr.bf16.mxu0 0
        %552 = vmatmul.mubr.bf16.gmra.mrb[0].mxu0 %v448
        %v553 = vpop.f32.mrb[0].mxu0
        %v554 = vadd.f32 0.0, %v553
        %v555 = vpop.f32.mrb[0].mxu0
        %v556 = vpop.f32.mrb[0].mxu0
        %v557 = vadd.f32 0.0, %v556
        %v558 = vpop.f32.mrb[0].mxu0
        %559 = vmatprep.mubr.bf16.mxu0 0
        %560 = vmatmul.mubr.bf16.gmra.mrb[0].mxu0 %v449
        %v561 = vpop.f32.mrb[0].mxu0
        %v562 = vadd.f32 0.0, %v561
        %v563 = vpop.f32.mrb[0].mxu0
        %v564 = vpop.f32.mrb[0].mxu0
        %v565 = vadd.f32 0.0, %v564
        %v566 = vpop.f32.mrb[0].mxu0
        %567 = vmatprep.mubr.bf16.mxu0 0
        %568 = vmatmul.mubr.bf16.gmra.mrb[0].mxu0 %v450
        %v569 = vpop.f32.mrb[0].mxu0
        %v570 = vadd.f32 0.0, %v569
        %v571 = vpop.f32.mrb[0].mxu0
        %v572 = vpop.f32.mrb[0].mxu0
        %v573 = vadd.f32 0.0, %v572
        %v574 = vpop.f32.mrb[0].mxu0
        %575 = vmatprep.mubr.bf16.mxu0 0
        %576 = vmatmul.mubr.bf16.gmra.mrb[0].mxu0 %v451
        %v577 = vpop.f32.mrb[0].mxu0
        %v578 = vadd.f32 0.0, %v577
        %v579 = vpop.f32.mrb[0].mxu0
        %v580 = vpop.f32.mrb[0].mxu0
        %v581 = vadd.f32 0.0, %v580
        %v582 = vpop.f32.mrb[0].mxu0
        %583 = vmatprep.mubr.bf16.mxu0 0
        %584 = vmatmul.mubr.bf16.gmra.mrb[0].mxu0 %v452
        %v585 = vpop.f32.mrb[0].mxu0
        %v586 = vadd.f32 0.0, %v585
        %v587 = vpop.f32.mrb[0].mxu0
        %v588 = vpop.f32.mrb[0].mxu0
        %v589 = vadd.f32 0.0, %v588
        %v590 = vpop.f32.mrb[0].mxu0
        %591 = vmatprep.mubr.bf16.mxu0 0
        %592 = vmatmul.mubr.bf16.gmra.mrb[0].mxu0 %v453
        %v593 = vpop.f32.mrb[0].mxu0
        %v594 = vadd.f32 0.0, %v593
        %v595 = vpop.f32.mrb[0].mxu0
        %v596 = vpop.f32.mrb[0].mxu0
        %v597 = vadd.f32 0.0, %v596
        %v598 = vpop.f32.mrb[0].mxu0
        %599 = vmatprep.mubr.bf16.mxu0 0
        %600 = vmatmul.mubr.bf16.gmra.mrb[0].mxu0 %v454
        %v601 = vpop.f32.mrb[0].mxu0
        %v602 = vadd.f32 0.0, %v601
        %v603 = vpop.f32.mrb[0].mxu0
        %v604 = vpop.f32.mrb[0].mxu0
        %v605 = vadd.f32 0.0, %v604
        %v606 = vpop.f32.mrb[0].mxu0
        %607 = vdwg.mxu0
        %v608 = vpack.c.bf16 %v549, %v546
        %v609 = vpack.c.bf16 %v557, %v554
        %v610 = vpack.c.bf16 %v565, %v562
        %v611 = vpack.c.bf16 %v573, %v570
        %v612 = vpack.c.bf16 %v581, %v578
        %v613 = vpack.c.bf16 %v589, %v586
        %v614 = vpack.c.bf16 %v597, %v594
        %v615 = vpack.c.bf16 %v605, %v602
        %v616 = vld [vmem:[%s2] sm:$0xf]
        %v617 = vld [vmem:[%s2 + $0x4] sm:$0xf]
        %v618 = vld [vmem:[%s2 + $0x8] sm:$0xf]
        %v619 = vld [vmem:[%s2 + $0xc] sm:$0xf]
        %v620 = vld [vmem:[%s2 + $0x10] sm:$0xf]
        %v621 = vld [vmem:[%s2 + $0x14] sm:$0xf]
        %v622 = vld [vmem:[%s2 + $0x18] sm:$0xf]
        %v623 = vld [vmem:[%s2 + $0x1c] sm:$0xf]
        %v624 = vld [vmem:[%s2 + $0x20] sm:$0xf]
        %v625 = vld [vmem:[%s2 + $0x24] sm:$0xf]
        %v626 = vld [vmem:[%s2 + $0x28] sm:$0xf]
        %v627 = vld [vmem:[%s2 + $0x2c] sm:$0xf]
        %v628 = vld [vmem:[%s2 + $0x30] sm:$0xf]
        %v629 = vld [vmem:[%s2 + $0x34] sm:$0xf]
        %v630 = vld [vmem:[%s2 + $0x38] sm:$0xf]
        %v631 = vld [vmem:[%s2 + $0x3c] sm:$0xf]
        %v632 = vld [vmem:[%s3] sm:$0x1]
        %v634 = vlaneseq
        %v635 = vshrl.u32 %v634, 7
        %v636 = vsub.s32 0, %v635
        %v637 = vrot.slane %v632, %v636
        %v655 = vunpack.c.l.b16 %v616
        %v656 = vunpack.c.l.b16 %v617
        %v657 = vunpack.c.l.b16 %v618
        %v658 = vunpack.c.l.b16 %v619
        %v659 = vunpack.c.l.b16 %v620
        %v660 = vunpack.c.l.b16 %v621
        %v661 = vunpack.c.l.b16 %v622
        %v662 = vunpack.c.l.b16 %v623
        %v663 = vunpack.c.l.b16 %v624
        %v664 = vunpack.c.l.b16 %v625
        %v665 = vunpack.c.l.b16 %v626
        %v666 = vunpack.c.l.b16 %v627
        %v667 = vunpack.c.l.b16 %v628
        %v668 = vunpack.c.l.b16 %v629
        %v669 = vunpack.c.l.b16 %v630
        %v670 = vunpack.c.l.b16 %v631
        %v671 = vpack.c.b16 %v656, %v655
        %v672 = vpack.c.b16 %v658, %v657
        %v673 = vpack.c.b16 %v660, %v659
        %v674 = vpack.c.b16 %v662, %v661
        %v675 = vpack.c.b16 %v664, %v663
        %v676 = vpack.c.b16 %v666, %v665
        %v677 = vpack.c.b16 %v668, %v667
        %v678 = vpack.c.b16 %v670, %v669
        %687 = vmatprep.subr.bf16.mxu0 0
        %688 = vmatpush1.bf16.msra.mxu0 %v671
        %689 = vmatprep.subr.bf16.mxu0 0
        %690 = vmatpush1.bf16.msra.mxu0 %v672
        %691 = vmatprep.subr.bf16.mxu0 0
        %692 = vmatpush1.bf16.msra.mxu0 %v673
        %693 = vmatprep.subr.bf16.mxu0 0
        %694 = vmatpush1.bf16.msra.mxu0 %v674
        %695 = vmatprep.subr.bf16.mxu0 0
        %696 = vmatpush1.bf16.msra.mxu0 %v675
        %697 = vmatprep.subr.bf16.mxu0 0
        %698 = vmatpush1.bf16.msra.mxu0 %v676
        %699 = vmatprep.subr.bf16.mxu0 0
        %700 = vmatpush1.bf16.msra.mxu0 %v677
        %701 = vmatprep.subr.bf16.mxu0 0
        %702 = vmatpush1.bf16.msra.mxu0 %v678
        %703 = vmatprep.subr.bf16.mxu0 0
        %704 = vmatpush1.bf16.msra.mxu0 0
        %705 = vmatprep.subr.bf16.mxu0 0
        %706 = vmatpush1.bf16.msra.mxu0 0
        %707 = vmatprep.subr.bf16.mxu0 0
        %708 = vmatpush1.bf16.msra.mxu0 0
        %709 = vmatprep.subr.bf16.mxu0 0
        %710 = vmatpush1.bf16.msra.mxu0 0
        %711 = vmatprep.subr.bf16.mxu0 0
        %712 = vmatpush1.bf16.msra.mxu0 0
        %713 = vmatprep.subr.bf16.mxu0 0
        %714 = vmatpush1.bf16.msra.mxu0 0
        %715 = vmatprep.subr.bf16.mxu0 0
        %716 = vmatpush1.bf16.msra.mxu0 0
        %717 = vmatprep.subr.bf16.mxu0 0
        %718 = vmatpush1.bf16.msra.mxu0 0
        %719 = vmatprep.mubr.bf16.mxu0 0
        %720 = vmatmul.mubr.bf16.gmra.mrb[0].mxu0 %v608
        %v721 = vpop.f32.mrb[0].mxu0
        %v722 = vadd.f32 %v637, %v721
        %v723 = vpop.f32.mrb[0].mxu0
        %v724 = vpop.f32.mrb[0].mxu0
        %v725 = vadd.f32 %v637, %v724
        %v726 = vpop.f32.mrb[0].mxu0
        %727 = vmatprep.mubr.bf16.mxu0 0
        %728 = vmatmul.mubr.bf16.gmra.mrb[0].mxu0 %v609
        %v729 = vpop.f32.mrb[0].mxu0
        %v730 = vadd.f32 %v637, %v729
        %v731 = vpop.f32.mrb[0].mxu0
        %v732 = vpop.f32.mrb[0].mxu0
        %v733 = vadd.f32 %v637, %v732
        %v734 = vpop.f32.mrb[0].mxu0
        %735 = vmatprep.mubr.bf16.mxu0 0
        %736 = vmatmul.mubr.bf16.gmra.mrb[0].mxu0 %v610
        %v737 = vpop.f32.mrb[0].mxu0
        %v738 = vadd.f32 %v637, %v737
        %v739 = vpop.f32.mrb[0].mxu0
        %v740 = vpop.f32.mrb[0].mxu0
        %v741 = vadd.f32 %v637, %v740
        %v742 = vpop.f32.mrb[0].mxu0
        %743 = vmatprep.mubr.bf16.mxu0 0
        %744 = vmatmul.mubr.bf16.gmra.mrb[0].mxu0 %v611
        %v745 = vpop.f32.mrb[0].mxu0
        %v746 = vadd.f32 %v637, %v745
        %v747 = vpop.f32.mrb[0].mxu0
        %v748 = vpop.f32.mrb[0].mxu0
        %v749 = vadd.f32 %v637, %v748
        %v750 = vpop.f32.mrb[0].mxu0
        %751 = vmatprep.mubr.bf16.mxu0 0
        %752 = vmatmul.mubr.bf16.gmra.mrb[0].mxu0 %v612
        %v753 = vpop.f32.mrb[0].mxu0
        %v754 = vadd.f32 %v637, %v753
        %v755 = vpop.f32.mrb[0].mxu0
        %v756 = vpop.f32.mrb[0].mxu0
        %v757 = vadd.f32 %v637, %v756
        %v758 = vpop.f32.mrb[0].mxu0
        %759 = vmatprep.mubr.bf16.mxu0 0
        %760 = vmatmul.mubr.bf16.gmra.mrb[0].mxu0 %v613
        %v761 = vpop.f32.mrb[0].mxu0
        %v762 = vadd.f32 %v637, %v761
        %v763 = vpop.f32.mrb[0].mxu0
        %v764 = vpop.f32.mrb[0].mxu0
        %v765 = vadd.f32 %v637, %v764
        %v766 = vpop.f32.mrb[0].mxu0
        %767 = vmatprep.mubr.bf16.mxu0 0
        %768 = vmatmul.mubr.bf16.gmra.mrb[0].mxu0 %v614
        %v769 = vpop.f32.mrb[0].mxu0
        %v770 = vadd.f32 %v637, %v769
        %v771 = vpop.f32.mrb[0].mxu0
        %v772 = vpop.f32.mrb[0].mxu0
        %v773 = vadd.f32 %v637, %v772
        %v774 = vpop.f32.mrb[0].mxu0
        %775 = vmatprep.mubr.bf16.mxu0 0
        %776 = vmatmul.mubr.bf16.gmra.mrb[0].mxu0 %v615
        %v777 = vpop.f32.mrb[0].mxu0
        %v778 = vadd.f32 %v637, %v777
        %v779 = vpop.f32.mrb[0].mxu0
        %v780 = vpop.f32.mrb[0].mxu0
        %v781 = vadd.f32 %v637, %v780
        %v782 = vpop.f32.mrb[0].mxu0
        %783 = vdwg.mxu0
        %v784 = vmax.f32 %v722, 0.0
        %v785 = vmax.f32 %v725, 0.0
        %v786 = vmax.f32 %v730, 0.0
        %v787 = vmax.f32 %v733, 0.0
        %v788 = vmax.f32 %v738, 0.0
        %v789 = vmax.f32 %v741, 0.0
        %v790 = vmax.f32 %v746, 0.0
        %v791 = vmax.f32 %v749, 0.0
        %v792 = vmax.f32 %v754, 0.0
        %v793 = vmax.f32 %v757, 0.0
        %v794 = vmax.f32 %v762, 0.0
        %v795 = vmax.f32 %v765, 0.0
        %v796 = vmax.f32 %v770, 0.0
        %v797 = vmax.f32 %v773, 0.0
        %v798 = vmax.f32 %v778, 0.0
        %v799 = vmax.f32 %v781, 0.0
        %v800 = vpack.c.bf16 %v785, %v784
        %v801 = vpack.c.bf16 %v787, %v786
        %v802 = vpack.c.bf16 %v789, %v788
        %v803 = vpack.c.bf16 %v791, %v790
        %v804 = vpack.c.bf16 %v793, %v792
        %v805 = vpack.c.bf16 %v795, %v794
        %v806 = vpack.c.bf16 %v797, %v796
        %v807 = vpack.c.bf16 %v799, %v798
        %808 = vmatprep.subr.bf16.mxu0 0
        %809 = vmatpush1.bf16.msra.mxu0 %v800
        %810 = vmatprep.subr.bf16.mxu0 0
        %811 = vmatpush1.bf16.msra.mxu0 %v801
        %812 = vmatprep.subr.bf16.mxu0 0
        %813 = vmatpush1.bf16.msra.mxu0 %v802
        %814 = vmatprep.subr.bf16.mxu0 0
        %815 = vmatpush1.bf16.msra.mxu0 %v803
        %816 = vmatprep.subr.bf16.mxu0 0
        %817 = vmatpush1.bf16.msra.mxu0 %v804
        %818 = vmatprep.subr.bf16.mxu0 0
        %819 = vmatpush1.bf16.msra.mxu0 %v805
        %820 = vmatprep.subr.bf16.mxu0 0
        %821 = vmatpush1.bf16.msra.mxu0 %v806
        %822 = vmatprep.subr.bf16.mxu0 0
        %823 = vmatpush1.bf16.msra.mxu0 %v807
        %824 = vmatprep.subr.bf16.mxu0 0
        %825 = vmatpush1.bf16.msra.mxu0 0
        %826 = vmatprep.subr.bf16.mxu0 0
        %827 = vmatpush1.bf16.msra.mxu0 0
        %828 = vmatprep.subr.bf16.mxu0 0
        %829 = vmatpush1.bf16.msra.mxu0 0
        %830 = vmatprep.subr.bf16.mxu0 0
        %831 = vmatpush1.bf16.msra.mxu0 0
        %832 = vmatprep.subr.bf16.mxu0 0
        %833 = vmatpush1.bf16.msra.mxu0 0
        %834 = vmatprep.subr.bf16.mxu0 0
        %835 = vmatpush1.bf16.msra.mxu0 0
        %836 = vmatprep.subr.bf16.mxu0 0
        %837 = vmatpush1.bf16.msra.mxu0 0
        %838 = vmatprep.subr.bf16.mxu0 0
        %839 = vmatpush1.bf16.msra.mxu0 0
        %840 = vmatprep.mubr.bf16.mxu0 0
        %841 = vmatmul.mubr.bf16.gmra.mrb[0].mxu0 %v447
        %v842 = vpop.f32.mrb[0].mxu0
        %v843 = vadd.f32 0.0, %v842
        %v844 = vpop.f32.mrb[0].mxu0
        %v845 = vpop.f32.mrb[0].mxu0
        %v846 = vadd.f32 0.0, %v845
        %v847 = vpop.f32.mrb[0].mxu0
        %848 = vmatprep.mubr.bf16.mxu0 0
        %849 = vmatmul.mubr.bf16.gmra.mrb[0].mxu0 %v448
        %v850 = vpop.f32.mrb[0].mxu0
        %v851 = vadd.f32 0.0, %v850
        %v852 = vpop.f32.mrb[0].mxu0
        %v853 = vpop.f32.mrb[0].mxu0
        %v854 = vadd.f32 0.0, %v853
        %v855 = vpop.f32.mrb[0].mxu0
        %856 = vmatprep.mubr.bf16.mxu0 0
        %857 = vmatmul.mubr.bf16.gmra.mrb[0].mxu0 %v449
        %v858 = vpop.f32.mrb[0].mxu0
        %v859 = vadd.f32 0.0, %v858
        %v860 = vpop.f32.mrb[0].mxu0
        %v861 = vpop.f32.mrb[0].mxu0
        %v862 = vadd.f32 0.0, %v861
        %v863 = vpop.f32.mrb[0].mxu0
        %864 = vmatprep.mubr.bf16.mxu0 0
        %865 = vmatmul.mubr.bf16.gmra.mrb[0].mxu0 %v450
        %v866 = vpop.f32.mrb[0].mxu0
        %v867 = vadd.f32 0.0, %v866
        %v868 = vpop.f32.mrb[0].mxu0
        %v869 = vpop.f32.mrb[0].mxu0
        %v870 = vadd.f32 0.0, %v869
        %v871 = vpop.f32.mrb[0].mxu0
        %872 = vmatprep.mubr.bf16.mxu0 0
        %873 = vmatmul.mubr.bf16.gmra.mrb[0].mxu0 %v451
        %v874 = vpop.f32.mrb[0].mxu0
        %v875 = vadd.f32 0.0, %v874
        %v876 = vpop.f32.mrb[0].mxu0
        %v877 = vpop.f32.mrb[0].mxu0
        %v878 = vadd.f32 0.0, %v877
        %v879 = vpop.f32.mrb[0].mxu0
        %880 = vmatprep.mubr.bf16.mxu0 0
        %881 = vmatmul.mubr.bf16.gmra.mrb[0].mxu0 %v452
        %v882 = vpop.f32.mrb[0].mxu0
        %v883 = vadd.f32 0.0, %v882
        %v884 = vpop.f32.mrb[0].mxu0
        %v885 = vpop.f32.mrb[0].mxu0
        %v886 = vadd.f32 0.0, %v885
        %v887 = vpop.f32.mrb[0].mxu0
        %888 = vmatprep.mubr.bf16.mxu0 0
        %889 = vmatmul.mubr.bf16.gmra.mrb[0].mxu0 %v453
        %v890 = vpop.f32.mrb[0].mxu0
        %v891 = vadd.f32 0.0, %v890
        %v892 = vpop.f32.mrb[0].mxu0
        %v893 = vpop.f32.mrb[0].mxu0
        %v894 = vadd.f32 0.0, %v893
        %v895 = vpop.f32.mrb[0].mxu0
        %896 = vmatprep.mubr.bf16.mxu0 0
        %897 = vmatmul.mubr.bf16.gmra.mrb[0].mxu0 %v454
        %v898 = vpop.f32.mrb[0].mxu0
        %v899 = vadd.f32 0.0, %v898
        %v900 = vpop.f32.mrb[0].mxu0
        %v901 = vpop.f32.mrb[0].mxu0
        %v902 = vadd.f32 0.0, %v901
        %v903 = vpop.f32.mrb[0].mxu0
        %904 = vdwg.mxu0
        %v905 = vpack.c.bf16 %v846, %v843
        %v906 = vpack.c.bf16 %v854, %v851
        %v907 = vpack.c.bf16 %v862, %v859
        %v908 = vpack.c.bf16 %v870, %v867
        %v909 = vpack.c.bf16 %v878, %v875
        %v910 = vpack.c.bf16 %v886, %v883
        %v911 = vpack.c.bf16 %v894, %v891
        %v912 = vpack.c.bf16 %v902, %v899
        %v913 = vld [vmem:[%s4] sm:$0xf]
        %v914 = vld [vmem:[%s4 + $0x4] sm:$0xf]
        %v915 = vld [vmem:[%s4 + $0x8] sm:$0xf]
        %v916 = vld [vmem:[%s4 + $0xc] sm:$0xf]
        %v917 = vld [vmem:[%s4 + $0x10] sm:$0xf]
        %v918 = vld [vmem:[%s4 + $0x14] sm:$0xf]
        %v919 = vld [vmem:[%s4 + $0x18] sm:$0xf]
        %v920 = vld [vmem:[%s4 + $0x1c] sm:$0xf]
        %v929 = vunpack.c.l.b16 %v913
        %v930 = vunpack.c.l.b16 %v914
        %v931 = vunpack.c.l.b16 %v915
        %v932 = vunpack.c.l.b16 %v916
        %v933 = vunpack.c.l.b16 %v917
        %v934 = vunpack.c.l.b16 %v918
        %v935 = vunpack.c.l.b16 %v919
        %v936 = vunpack.c.l.b16 %v920
        %v937 = vpack.c.b16 %v930, %v929
        %v938 = vpack.c.b16 %v932, %v931
        %v939 = vpack.c.b16 %v934, %v933
        %v940 = vpack.c.b16 %v936, %v935
        %vm945 = vcmask 523264
        %v947 = vsel %vm945, %v905, 0
        %v950 = vsel %vm945, %v906, 0
        %v953 = vsel %vm945, %v907, 0
        %v956 = vsel %vm945, %v908, 0
        %v959 = vsel %vm945, %v909, 0
        %v962 = vsel %vm945, %v910, 0
        %v965 = vsel %vm945, %v911, 0
        %v968 = vsel %vm945, %v912, 0
        %970 = vmatprep.subr.bf16.mxu0 0
        %971 = vmatpush1.bf16.msra.mxu0 %v937
        %972 = vmatprep.subr.bf16.mxu0 0
        %973 = vmatpush1.bf16.msra.mxu0 %v938
        %974 = vmatprep.subr.bf16.mxu0 0
        %975 = vmatpush1.bf16.msra.mxu0 %v939
        %976 = vmatprep.subr.bf16.mxu0 0
        %977 = vmatpush1.bf16.msra.mxu0 %v940
        %978 = vmatprep.subr.bf16.mxu0 0
        %979 = vmatpush1.bf16.msra.mxu0 0
        %980 = vmatprep.subr.bf16.mxu0 0
        %981 = vmatpush1.bf16.msra.mxu0 0
        %982 = vmatprep.subr.bf16.mxu0 0
        %983 = vmatpush1.bf16.msra.mxu0 0
        %984 = vmatprep.subr.bf16.mxu0 0
        %985 = vmatpush1.bf16.msra.mxu0 0
        %986 = vmatprep.subr.bf16.mxu0 0
        %987 = vmatpush1.bf16.msra.mxu0 0
        %988 = vmatprep.subr.bf16.mxu0 0
        %989 = vmatpush1.bf16.msra.mxu0 0
        %990 = vmatprep.subr.bf16.mxu0 0
        %991 = vmatpush1.bf16.msra.mxu0 0
        %992 = vmatprep.subr.bf16.mxu0 0
        %993 = vmatpush1.bf16.msra.mxu0 0
        %994 = vmatprep.subr.bf16.mxu0 0
        %995 = vmatpush1.bf16.msra.mxu0 0
        %996 = vmatprep.subr.bf16.mxu0 0
        %997 = vmatpush1.bf16.msra.mxu0 0
        %998 = vmatprep.subr.bf16.mxu0 0
        %999 = vmatpush1.bf16.msra.mxu0 0
        %1000 = vmatprep.subr.bf16.mxu0 0
        %1001 = vmatpush1.bf16.msra.mxu0 0
        %1002 = vmatprep.mubr.bf16.mxu0 0
        %1003 = vmatmul.mubr.bf16.gmra.mrb[0].mxu0 %v947
        %v1004 = vpop.f32.mrb[0].mxu0
        %v1005 = vadd.f32 0.0, %v1004
        %v1006 = vpop.f32.mrb[0].mxu0
        %v1007 = vpop.f32.mrb[0].mxu0
        %v1008 = vadd.f32 0.0, %v1007
        %v1009 = vpop.f32.mrb[0].mxu0
        %1010 = vmatprep.mubr.bf16.mxu0 0
        %1011 = vmatmul.mubr.bf16.gmra.mrb[0].mxu0 %v950
        %v1012 = vpop.f32.mrb[0].mxu0
        %v1013 = vadd.f32 0.0, %v1012
        %v1014 = vpop.f32.mrb[0].mxu0
        %v1015 = vpop.f32.mrb[0].mxu0
        %v1016 = vadd.f32 0.0, %v1015
        %v1017 = vpop.f32.mrb[0].mxu0
        %1018 = vmatprep.mubr.bf16.mxu0 0
        %1019 = vmatmul.mubr.bf16.gmra.mrb[0].mxu0 %v953
        %v1020 = vpop.f32.mrb[0].mxu0
        %v1021 = vadd.f32 0.0, %v1020
        %v1022 = vpop.f32.mrb[0].mxu0
        %v1023 = vpop.f32.mrb[0].mxu0
        %v1024 = vadd.f32 0.0, %v1023
        %v1025 = vpop.f32.mrb[0].mxu0
        %1026 = vmatprep.mubr.bf16.mxu0 0
        %1027 = vmatmul.mubr.bf16.gmra.mrb[0].mxu0 %v956
        %v1028 = vpop.f32.mrb[0].mxu0
        %v1029 = vadd.f32 0.0, %v1028
        %v1030 = vpop.f32.mrb[0].mxu0
        %v1031 = vpop.f32.mrb[0].mxu0
        %v1032 = vadd.f32 0.0, %v1031
        %v1033 = vpop.f32.mrb[0].mxu0
        %1034 = vmatprep.mubr.bf16.mxu0 0
        %1035 = vmatmul.mubr.bf16.gmra.mrb[0].mxu0 %v959
        %v1036 = vpop.f32.mrb[0].mxu0
        %v1037 = vadd.f32 0.0, %v1036
        %v1038 = vpop.f32.mrb[0].mxu0
        %v1039 = vpop.f32.mrb[0].mxu0
        %v1040 = vadd.f32 0.0, %v1039
        %v1041 = vpop.f32.mrb[0].mxu0
        %1042 = vmatprep.mubr.bf16.mxu0 0
        %1043 = vmatmul.mubr.bf16.gmra.mrb[0].mxu0 %v962
        %v1044 = vpop.f32.mrb[0].mxu0
        %v1045 = vadd.f32 0.0, %v1044
        %v1046 = vpop.f32.mrb[0].mxu0
        %v1047 = vpop.f32.mrb[0].mxu0
        %v1048 = vadd.f32 0.0, %v1047
        %v1049 = vpop.f32.mrb[0].mxu0
        %1050 = vmatprep.mubr.bf16.mxu0 0
        %1051 = vmatmul.mubr.bf16.gmra.mrb[0].mxu0 %v965
        %v1052 = vpop.f32.mrb[0].mxu0
        %v1053 = vadd.f32 0.0, %v1052
        %v1054 = vpop.f32.mrb[0].mxu0
        %v1055 = vpop.f32.mrb[0].mxu0
        %v1056 = vadd.f32 0.0, %v1055
        %v1057 = vpop.f32.mrb[0].mxu0
        %1058 = vmatprep.mubr.bf16.mxu0 0
        %1059 = vmatmul.mubr.bf16.gmra.mrb[0].mxu0 %v968
        %v1060 = vpop.f32.mrb[0].mxu0
        %v1061 = vadd.f32 0.0, %v1060
        %v1062 = vpop.f32.mrb[0].mxu0
        %v1063 = vpop.f32.mrb[0].mxu0
        %v1064 = vadd.f32 0.0, %v1063
        %v1065 = vpop.f32.mrb[0].mxu0
        %1066 = vdwg.mxu0
        %v1067 = vmul.f32 %v1005, 0.5
        %v1068 = vmul.f32 %v1008, 0.5
        %v1069 = vmul.f32 %v1013, 0.5
        %v1070 = vmul.f32 %v1016, 0.5
        %v1071 = vmul.f32 %v1021, 0.5
        %v1072 = vmul.f32 %v1024, 0.5
        %v1073 = vmul.f32 %v1029, 0.5
        %v1074 = vmul.f32 %v1032, 0.5
        %v1075 = vmul.f32 %v1037, 0.5
        %v1076 = vmul.f32 %v1040, 0.5
        %v1077 = vmul.f32 %v1045, 0.5
        %v1078 = vmul.f32 %v1048, 0.5
        %v1079 = vmul.f32 %v1053, 0.5
        %v1080 = vmul.f32 %v1056, 0.5
        %v1081 = vmul.f32 %v1061, 0.5
        %v1082 = vmul.f32 %v1064, 0.5
        %v1083 = vmul.f32 %v1067, 1.442695
        %v1084 = vpow.pop %v1083
        %v1085 = vmul.f32 %v1068, 1.442695
        %v1086 = vpow.pop %v1085
        %v1087 = vmul.f32 %v1069, 1.442695
        %v1088 = vpow.pop %v1087
        %v1089 = vmul.f32 %v1070, 1.442695
        %v1090 = vpow.pop %v1089
        %v1091 = vmul.f32 %v1071, 1.442695
        %v1092 = vpow.pop %v1091
        %v1093 = vmul.f32 %v1072, 1.442695
        %v1094 = vpow.pop %v1093
        %v1095 = vmul.f32 %v1073, 1.442695
        %v1096 = vpow.pop %v1095
        %v1097 = vmul.f32 %v1074, 1.442695
        %v1098 = vpow.pop %v1097
        %v1099 = vmul.f32 %v1075, 1.442695
        %v1100 = vpow.pop %v1099
        %v1101 = vmul.f32 %v1076, 1.442695
        %v1102 = vpow.pop %v1101
        %v1103 = vmul.f32 %v1077, 1.442695
        %v1104 = vpow.pop %v1103
        %v1105 = vmul.f32 %v1078, 1.442695
        %v1106 = vpow.pop %v1105
        %v1107 = vmul.f32 %v1079, 1.442695
        %v1108 = vpow.pop %v1107
        %v1109 = vmul.f32 %v1080, 1.442695
        %v1110 = vpow.pop %v1109
        %v1111 = vmul.f32 %v1081, 1.442695
        %v1112 = vpow.pop %v1111
        %v1113 = vmul.f32 %v1082, 1.442695
        %v1114 = vpow.pop %v1113
        %v1115 = vld [vmem:[%s381] sm:$0xff]
        %v1116 = vld [vmem:[%s381 + $0x8] sm:$0xff]
        %v1117 = vld [vmem:[%s381 + $0x10] sm:$0xff]
        %v1118 = vld [vmem:[%s381 + $0x18] sm:$0xff]
        %v1119 = vld [vmem:[%s381 + $0x20] sm:$0xff]
        %v1120 = vld [vmem:[%s381 + $0x28] sm:$0xff]
        %v1121 = vld [vmem:[%s381 + $0x30] sm:$0xff]
        %v1122 = vld [vmem:[%s381 + $0x38] sm:$0xff]
        %v1123 = vld [vmem:[%s381 + $0x40] sm:$0xff]
        %v1124 = vld [vmem:[%s381 + $0x48] sm:$0xff]
        %v1125 = vld [vmem:[%s381 + $0x50] sm:$0xff]
        %v1126 = vld [vmem:[%s381 + $0x58] sm:$0xff]
        %v1127 = vld [vmem:[%s381 + $0x60] sm:$0xff]
        %v1128 = vld [vmem:[%s381 + $0x68] sm:$0xff]
        %v1129 = vld [vmem:[%s381 + $0x70] sm:$0xff]
        %v1130 = vld [vmem:[%s381 + $0x78] sm:$0xff]
        %1147 = vrot.lane.b32.xlu0 %v1115, 64
        %v1148 = vpop.permute.xlu0 %1147
        %1149 = vrot.lane.b32.xlu0 %v1116, 64
        %v1150 = vpop.permute.xlu0 %1149
        %1151 = vrot.lane.b32.xlu0 %v1117, 64
        %v1152 = vpop.permute.xlu0 %1151
        %1153 = vrot.lane.b32.xlu0 %v1118, 64
        %v1154 = vpop.permute.xlu0 %1153
        %1155 = vrot.lane.b32.xlu0 %v1119, 64
        %v1156 = vpop.permute.xlu0 %1155
        %1157 = vrot.lane.b32.xlu0 %v1120, 64
        %v1158 = vpop.permute.xlu0 %1157
        %1159 = vrot.lane.b32.xlu0 %v1121, 64
        %v1160 = vpop.permute.xlu0 %1159
        %1161 = vrot.lane.b32.xlu0 %v1122, 64
        %v1162 = vpop.permute.xlu0 %1161
        %1163 = vrot.lane.b32.xlu0 %v1123, 64
        %v1164 = vpop.permute.xlu0 %1163
        %1165 = vrot.lane.b32.xlu0 %v1124, 64
        %v1166 = vpop.permute.xlu0 %1165
        %1167 = vrot.lane.b32.xlu0 %v1125, 64
        %v1168 = vpop.permute.xlu0 %1167
        %1169 = vrot.lane.b32.xlu0 %v1126, 64
        %v1170 = vpop.permute.xlu0 %1169
        %1171 = vrot.lane.b32.xlu0 %v1127, 64
        %v1172 = vpop.permute.xlu0 %1171
        %1173 = vrot.lane.b32.xlu0 %v1128, 64
        %v1174 = vpop.permute.xlu0 %1173
        %1175 = vrot.lane.b32.xlu0 %v1129, 64
        %v1176 = vpop.permute.xlu0 %1175
        %1177 = vrot.lane.b32.xlu0 %v1130, 64
        %v1178 = vpop.permute.xlu0 %1177
        %v1195 = vmul.f32 %v1084, %v1148
        %v1196 = vmul.f32 %v1086, %v1150
        %v1197 = vmul.f32 %v1088, %v1152
        %v1198 = vmul.f32 %v1090, %v1154
        %v1199 = vmul.f32 %v1092, %v1156
        %v1200 = vmul.f32 %v1094, %v1158
        %v1201 = vmul.f32 %v1096, %v1160
        %v1202 = vmul.f32 %v1098, %v1162
        %v1203 = vmul.f32 %v1100, %v1164
        %v1204 = vmul.f32 %v1102, %v1166
        %v1205 = vmul.f32 %v1104, %v1168
        %v1206 = vmul.f32 %v1106, %v1170
        %v1207 = vmul.f32 %v1108, %v1172
        %v1208 = vmul.f32 %v1110, %v1174
        %v1209 = vmul.f32 %v1112, %v1176
        %v1210 = vmul.f32 %v1114, %v1178
        %1227 = vrot.lane.b32.xlu0 %v1195, 64
        %v1228 = vpop.permute.xlu0 %1227
        %1229 = vrot.lane.b32.xlu0 %v1196, 64
        %v1230 = vpop.permute.xlu0 %1229
        %1231 = vrot.lane.b32.xlu0 %v1197, 64
        %v1232 = vpop.permute.xlu0 %1231
        %1233 = vrot.lane.b32.xlu0 %v1198, 64
        %v1234 = vpop.permute.xlu0 %1233
        %1235 = vrot.lane.b32.xlu0 %v1199, 64
        %v1236 = vpop.permute.xlu0 %1235
        %1237 = vrot.lane.b32.xlu0 %v1200, 64
        %v1238 = vpop.permute.xlu0 %1237
        %1239 = vrot.lane.b32.xlu0 %v1201, 64
        %v1240 = vpop.permute.xlu0 %1239
        %1241 = vrot.lane.b32.xlu0 %v1202, 64
        %v1242 = vpop.permute.xlu0 %1241
        %1243 = vrot.lane.b32.xlu0 %v1203, 64
        %v1244 = vpop.permute.xlu0 %1243
        %1245 = vrot.lane.b32.xlu0 %v1204, 64
        %v1246 = vpop.permute.xlu0 %1245
        %1247 = vrot.lane.b32.xlu0 %v1205, 64
        %v1248 = vpop.permute.xlu0 %1247
        %1249 = vrot.lane.b32.xlu0 %v1206, 64
        %v1250 = vpop.permute.xlu0 %1249
        %1251 = vrot.lane.b32.xlu0 %v1207, 64
        %v1252 = vpop.permute.xlu0 %1251
        %1253 = vrot.lane.b32.xlu0 %v1208, 64
        %v1254 = vpop.permute.xlu0 %1253
        %1255 = vrot.lane.b32.xlu0 %v1209, 64
        %v1256 = vpop.permute.xlu0 %1255
        %1257 = vrot.lane.b32.xlu0 %v1210, 64
        %v1258 = vpop.permute.xlu0 %1257
        %v1275 = vadd.f32 %v1005, %v1228
        %v1276 = vadd.f32 %v1008, %v1230
        %v1277 = vadd.f32 %v1013, %v1232
        %v1278 = vadd.f32 %v1016, %v1234
        %v1279 = vadd.f32 %v1021, %v1236
        %v1280 = vadd.f32 %v1024, %v1238
        %v1281 = vadd.f32 %v1029, %v1240
        %v1282 = vadd.f32 %v1032, %v1242
        %v1283 = vadd.f32 %v1037, %v1244
        %v1284 = vadd.f32 %v1040, %v1246
        %v1285 = vadd.f32 %v1045, %v1248
        %v1286 = vadd.f32 %v1048, %v1250
        %v1287 = vadd.f32 %v1053, %v1252
        %v1288 = vadd.f32 %v1056, %v1254
        %v1289 = vadd.f32 %v1061, %v1256
        %v1290 = vadd.f32 %v1064, %v1258
        %v1291 = vpack.c.bf16 %v1276, %v1275
        %v1292 = vpack.c.bf16 %v1278, %v1277
        %v1293 = vpack.c.bf16 %v1280, %v1279
        %v1294 = vpack.c.bf16 %v1282, %v1281
        %v1295 = vpack.c.bf16 %v1284, %v1283
        %v1296 = vpack.c.bf16 %v1286, %v1285
        %v1297 = vpack.c.bf16 %v1288, %v1287
        %v1298 = vpack.c.bf16 %v1290, %v1289
        %1299 = vxpose.xlu0.c.b16.start [1/8] %v447, 128
        %1300 = vxpose.xlu0.c.b16.cont [2/8] %v448, 128
        %1301 = vxpose.xlu0.c.b16.cont [3/8] %v449, 128
        %1302 = vxpose.xlu0.c.b16.cont [4/8] %v450, 128
        %1303 = vxpose.xlu0.c.b16.cont [5/8] %v451, 128
        %1304 = vxpose.xlu0.c.b16.cont [6/8] %v452, 128
        %1305 = vxpose.xlu0.c.b16.cont [7/8] %v453, 128
        %1306 = vxpose.xlu0.c.b16.end [8/8] %v454, 128
        %v1307 = vpop.trf.xlu0
        %v1308 = vpop.trf.xlu0
        %v1309 = vpop.trf.xlu0
        %v1310 = vpop.trf.xlu0
        %v1311 = vpop.trf.xlu0
        %v1312 = vpop.trf.xlu0
        %v1313 = vpop.trf.xlu0
        %v1314 = vpop.trf.xlu0
        %1315 = vmatprep.subr.bf16.mxu0 0
        %1316 = vmatpush1.bf16.msra.mxu0 %v1291
        %1317 = vmatprep.subr.bf16.mxu0 0
        %1318 = vmatpush1.bf16.msra.mxu0 %v1292
        %1319 = vmatprep.subr.bf16.mxu0 0
        %1320 = vmatpush1.bf16.msra.mxu0 %v1293
        %1321 = vmatprep.subr.bf16.mxu0 0
        %1322 = vmatpush1.bf16.msra.mxu0 %v1294
        %1323 = vmatprep.subr.bf16.mxu0 0
        %1324 = vmatpush1.bf16.msra.mxu0 %v1295
        %1325 = vmatprep.subr.bf16.mxu0 0
        %1326 = vmatpush1.bf16.msra.mxu0 %v1296
        %1327 = vmatprep.subr.bf16.mxu0 0
        %1328 = vmatpush1.bf16.msra.mxu0 %v1297
        %1329 = vmatprep.subr.bf16.mxu0 0
        %1330 = vmatpush1.bf16.msra.mxu0 %v1298
        %1331 = vmatprep.subr.bf16.mxu0 0
        %1332 = vmatpush1.bf16.msra.mxu0 0
        %1333 = vmatprep.subr.bf16.mxu0 0
        %1334 = vmatpush1.bf16.msra.mxu0 0
        %1335 = vmatprep.subr.bf16.mxu0 0
        %1336 = vmatpush1.bf16.msra.mxu0 0
        %1337 = vmatprep.subr.bf16.mxu0 0
        %1338 = vmatpush1.bf16.msra.mxu0 0
        %1339 = vmatprep.subr.bf16.mxu0 0
        %1340 = vmatpush1.bf16.msra.mxu0 0
        %1341 = vmatprep.subr.bf16.mxu0 0
        %1342 = vmatpush1.bf16.msra.mxu0 0
        %1343 = vmatprep.subr.bf16.mxu0 0
        %1344 = vmatpush1.bf16.msra.mxu0 0
        %1345 = vmatprep.subr.bf16.mxu0 0
        %1346 = vmatpush1.bf16.msra.mxu0 0
        %1347 = vmatprep.mubr.bf16.mxu0 0
        %1348 = vmatmul.mubr.bf16.gmra.mrb[0].mxu0 %v1307
        %v1349 = vpop.f32.mrb[0].mxu0
        %v1350 = vadd.f32 0.0, %v1349
        %v1351 = vpop.f32.mrb[0].mxu0
        %v1352 = vpop.f32.mrb[0].mxu0
        %v1353 = vadd.f32 0.0, %v1352
        %v1354 = vpop.f32.mrb[0].mxu0
        %1355 = vmatprep.mubr.bf16.mxu0 0
        %1356 = vmatmul.mubr.bf16.gmra.mrb[0].mxu0 %v1308
        %v1357 = vpop.f32.mrb[0].mxu0
        %v1358 = vadd.f32 0.0, %v1357
        %v1359 = vpop.f32.mrb[0].mxu0
        %v1360 = vpop.f32.mrb[0].mxu0
        %v1361 = vadd.f32 0.0, %v1360
        %v1362 = vpop.f32.mrb[0].mxu0
        %1363 = vmatprep.mubr.bf16.mxu0 0
        %1364 = vmatmul.mubr.bf16.gmra.mrb[0].mxu0 %v1309
        %v1365 = vpop.f32.mrb[0].mxu0
        %v1366 = vadd.f32 0.0, %v1365
        %v1367 = vpop.f32.mrb[0].mxu0
        %v1368 = vpop.f32.mrb[0].mxu0
        %v1369 = vadd.f32 0.0, %v1368
        %v1370 = vpop.f32.mrb[0].mxu0
        %1371 = vmatprep.mubr.bf16.mxu0 0
        %1372 = vmatmul.mubr.bf16.gmra.mrb[0].mxu0 %v1310
        %v1373 = vpop.f32.mrb[0].mxu0
        %v1374 = vadd.f32 0.0, %v1373
        %v1375 = vpop.f32.mrb[0].mxu0
        %v1376 = vpop.f32.mrb[0].mxu0
        %v1377 = vadd.f32 0.0, %v1376
        %v1378 = vpop.f32.mrb[0].mxu0
        %1379 = vmatprep.mubr.bf16.mxu0 0
        %1380 = vmatmul.mubr.bf16.gmra.mrb[0].mxu0 %v1311
        %v1381 = vpop.f32.mrb[0].mxu0
        %v1382 = vadd.f32 0.0, %v1381
        %v1383 = vpop.f32.mrb[0].mxu0
        %v1384 = vpop.f32.mrb[0].mxu0
        %v1385 = vadd.f32 0.0, %v1384
        %v1386 = vpop.f32.mrb[0].mxu0
        %1387 = vmatprep.mubr.bf16.mxu0 0
        %1388 = vmatmul.mubr.bf16.gmra.mrb[0].mxu0 %v1312
        %v1389 = vpop.f32.mrb[0].mxu0
        %v1390 = vadd.f32 0.0, %v1389
        %v1391 = vpop.f32.mrb[0].mxu0
        %v1392 = vpop.f32.mrb[0].mxu0
        %v1393 = vadd.f32 0.0, %v1392
        %v1394 = vpop.f32.mrb[0].mxu0
        %1395 = vmatprep.mubr.bf16.mxu0 0
        %1396 = vmatmul.mubr.bf16.gmra.mrb[0].mxu0 %v1313
        %v1397 = vpop.f32.mrb[0].mxu0
        %v1398 = vadd.f32 0.0, %v1397
        %v1399 = vpop.f32.mrb[0].mxu0
        %v1400 = vpop.f32.mrb[0].mxu0
        %v1401 = vadd.f32 0.0, %v1400
        %v1402 = vpop.f32.mrb[0].mxu0
        %1403 = vmatprep.mubr.bf16.mxu0 0
        %1404 = vmatmul.mubr.bf16.gmra.mrb[0].mxu0 %v1314
        %v1405 = vpop.f32.mrb[0].mxu0
        %v1406 = vadd.f32 0.0, %v1405
        %v1407 = vpop.f32.mrb[0].mxu0
        %v1408 = vpop.f32.mrb[0].mxu0
        %v1409 = vadd.f32 0.0, %v1408
        %v1410 = vpop.f32.mrb[0].mxu0
        %1411 = vdwg.mxu0
        %v1412 = vpack.c.bf16 %v1353, %v1350
        %v1413 = vpack.c.bf16 %v1361, %v1358
        %v1414 = vpack.c.bf16 %v1369, %v1366
        %v1415 = vpack.c.bf16 %v1377, %v1374
        %v1416 = vpack.c.bf16 %v1385, %v1382
        %v1417 = vpack.c.bf16 %v1393, %v1390
        %v1418 = vpack.c.bf16 %v1401, %v1398
        %v1419 = vpack.c.bf16 %v1409, %v1406
        %v1420 = vld [vmem:[%s6] sm:$0xf]
        %v1421 = vld [vmem:[%s6 + $0x4] sm:$0xf]
        %v1422 = vld [vmem:[%s6 + $0x8] sm:$0xf]
        %v1423 = vld [vmem:[%s6 + $0xc] sm:$0xf]
        %v1424 = vld [vmem:[%s6 + $0x10] sm:$0xf]
        %v1425 = vld [vmem:[%s6 + $0x14] sm:$0xf]
        %v1426 = vld [vmem:[%s6 + $0x18] sm:$0xf]
        %v1427 = vld [vmem:[%s6 + $0x1c] sm:$0xf]
        %v1428 = vld [vmem:[%s7] sm:$0x1]
        %v1430 = vlaneseq
        %v1431 = vshrl.u32 %v1430, 7
        %v1432 = vsub.s32 0, %v1431
        %v1433 = vrot.slane %v1428, %v1432
        %v1443 = vunpack.c.l.b16 %v1420
        %v1444 = vunpack.c.l.b16 %v1421
        %v1445 = vunpack.c.l.b16 %v1422
        %v1446 = vunpack.c.l.b16 %v1423
        %v1447 = vunpack.c.l.b16 %v1424
        %v1448 = vunpack.c.l.b16 %v1425
        %v1449 = vunpack.c.l.b16 %v1426
        %v1450 = vunpack.c.l.b16 %v1427
        %v1451 = vpack.c.b16 %v1444, %v1443
        %v1452 = vpack.c.b16 %v1446, %v1445
        %v1453 = vpack.c.b16 %v1448, %v1447
        %v1454 = vpack.c.b16 %v1450, %v1449
        %v1460 = vsel %vm945, %v1412, 0
        %v1463 = vsel %vm945, %v1413, 0
        %v1466 = vsel %vm945, %v1414, 0
        %v1469 = vsel %vm945, %v1415, 0
        %v1472 = vsel %vm945, %v1416, 0
        %v1475 = vsel %vm945, %v1417, 0
        %v1478 = vsel %vm945, %v1418, 0
        %v1481 = vsel %vm945, %v1419, 0
        %1483 = vmatprep.subr.bf16.mxu0 0
        %1484 = vmatpush1.bf16.msra.mxu0 %v1451
        %1485 = vmatprep.subr.bf16.mxu0 0
        %1486 = vmatpush1.bf16.msra.mxu0 %v1452
        %1487 = vmatprep.subr.bf16.mxu0 0
        %1488 = vmatpush1.bf16.msra.mxu0 %v1453
        %1489 = vmatprep.subr.bf16.mxu0 0
        %1490 = vmatpush1.bf16.msra.mxu0 %v1454
        %1491 = vmatprep.subr.bf16.mxu0 0
        %1492 = vmatpush1.bf16.msra.mxu0 0
        %1493 = vmatprep.subr.bf16.mxu0 0
        %1494 = vmatpush1.bf16.msra.mxu0 0
        %1495 = vmatprep.subr.bf16.mxu0 0
        %1496 = vmatpush1.bf16.msra.mxu0 0
        %1497 = vmatprep.subr.bf16.mxu0 0
        %1498 = vmatpush1.bf16.msra.mxu0 0
        %1499 = vmatprep.subr.bf16.mxu0 0
        %1500 = vmatpush1.bf16.msra.mxu0 0
        %1501 = vmatprep.subr.bf16.mxu0 0
        %1502 = vmatpush1.bf16.msra.mxu0 0
        %1503 = vmatprep.subr.bf16.mxu0 0
        %1504 = vmatpush1.bf16.msra.mxu0 0
        %1505 = vmatprep.subr.bf16.mxu0 0
        %1506 = vmatpush1.bf16.msra.mxu0 0
        %1507 = vmatprep.subr.bf16.mxu0 0
        %1508 = vmatpush1.bf16.msra.mxu0 0
        %1509 = vmatprep.subr.bf16.mxu0 0
        %1510 = vmatpush1.bf16.msra.mxu0 0
        %1511 = vmatprep.subr.bf16.mxu0 0
        %1512 = vmatpush1.bf16.msra.mxu0 0
        %1513 = vmatprep.subr.bf16.mxu0 0
        %1514 = vmatpush1.bf16.msra.mxu0 0
        %1515 = vmatprep.mubr.bf16.mxu0 0
        %1516 = vmatmul.mubr.bf16.gmra.mrb[0].mxu0 %v1460
        %v1517 = vpop.f32.mrb[0].mxu0
        %v1518 = vadd.f32 %v1433, %v1517
        %v1519 = vpop.f32.mrb[0].mxu0
        %v1520 = vpop.f32.mrb[0].mxu0
        %v1521 = vadd.f32 %v1433, %v1520
        %v1522 = vpop.f32.mrb[0].mxu0
        %1523 = vmatprep.mubr.bf16.mxu0 0
        %1524 = vmatmul.mubr.bf16.gmra.mrb[0].mxu0 %v1463
        %v1525 = vpop.f32.mrb[0].mxu0
        %v1526 = vadd.f32 %v1433, %v1525
        %v1527 = vpop.f32.mrb[0].mxu0
        %v1528 = vpop.f32.mrb[0].mxu0
        %v1529 = vadd.f32 %v1433, %v1528
        %v1530 = vpop.f32.mrb[0].mxu0
        %1531 = vmatprep.mubr.bf16.mxu0 0
        %1532 = vmatmul.mubr.bf16.gmra.mrb[0].mxu0 %v1466
        %v1533 = vpop.f32.mrb[0].mxu0
        %v1534 = vadd.f32 %v1433, %v1533
        %v1535 = vpop.f32.mrb[0].mxu0
        %v1536 = vpop.f32.mrb[0].mxu0
        %v1537 = vadd.f32 %v1433, %v1536
        %v1538 = vpop.f32.mrb[0].mxu0
        %1539 = vmatprep.mubr.bf16.mxu0 0
        %1540 = vmatmul.mubr.bf16.gmra.mrb[0].mxu0 %v1469
        %v1541 = vpop.f32.mrb[0].mxu0
        %v1542 = vadd.f32 %v1433, %v1541
        %v1543 = vpop.f32.mrb[0].mxu0
        %v1544 = vpop.f32.mrb[0].mxu0
        %v1545 = vadd.f32 %v1433, %v1544
        %v1546 = vpop.f32.mrb[0].mxu0
        %1547 = vmatprep.mubr.bf16.mxu0 0
        %1548 = vmatmul.mubr.bf16.gmra.mrb[0].mxu0 %v1472
        %v1549 = vpop.f32.mrb[0].mxu0
        %v1550 = vadd.f32 %v1433, %v1549
        %v1551 = vpop.f32.mrb[0].mxu0
        %v1552 = vpop.f32.mrb[0].mxu0
        %v1553 = vadd.f32 %v1433, %v1552
        %v1554 = vpop.f32.mrb[0].mxu0
        %1555 = vmatprep.mubr.bf16.mxu0 0
        %1556 = vmatmul.mubr.bf16.gmra.mrb[0].mxu0 %v1475
        %v1557 = vpop.f32.mrb[0].mxu0
        %v1558 = vadd.f32 %v1433, %v1557
        %v1559 = vpop.f32.mrb[0].mxu0
        %v1560 = vpop.f32.mrb[0].mxu0
        %v1561 = vadd.f32 %v1433, %v1560
        %v1562 = vpop.f32.mrb[0].mxu0
        %1563 = vmatprep.mubr.bf16.mxu0 0
        %1564 = vmatmul.mubr.bf16.gmra.mrb[0].mxu0 %v1478
        %v1565 = vpop.f32.mrb[0].mxu0
        %v1566 = vadd.f32 %v1433, %v1565
        %v1567 = vpop.f32.mrb[0].mxu0
        %v1568 = vpop.f32.mrb[0].mxu0
        %v1569 = vadd.f32 %v1433, %v1568
        %v1570 = vpop.f32.mrb[0].mxu0
        %1571 = vmatprep.mubr.bf16.mxu0 0
        %1572 = vmatmul.mubr.bf16.gmra.mrb[0].mxu0 %v1481
        %v1573 = vpop.f32.mrb[0].mxu0
        %v1574 = vadd.f32 %v1433, %v1573
        %v1575 = vpop.f32.mrb[0].mxu0
        %v1576 = vpop.f32.mrb[0].mxu0
        %v1577 = vadd.f32 %v1433, %v1576
        %v1578 = vpop.f32.mrb[0].mxu0
        %1579 = vdwg.mxu0
        %v1580 = vxor.u32 %v1518, 2147483648
        %v1581 = vxor.u32 %v1521, 2147483648
        %v1582 = vxor.u32 %v1526, 2147483648
        %v1583 = vxor.u32 %v1529, 2147483648
        %v1584 = vxor.u32 %v1534, 2147483648
        %v1585 = vxor.u32 %v1537, 2147483648
        %v1586 = vxor.u32 %v1542, 2147483648
        %v1587 = vxor.u32 %v1545, 2147483648
        %v1588 = vxor.u32 %v1550, 2147483648
        %v1589 = vxor.u32 %v1553, 2147483648
        %v1590 = vxor.u32 %v1558, 2147483648
        %v1591 = vxor.u32 %v1561, 2147483648
        %v1592 = vxor.u32 %v1566, 2147483648
        %v1593 = vxor.u32 %v1569, 2147483648
        %v1594 = vxor.u32 %v1574, 2147483648
        %v1595 = vxor.u32 %v1577, 2147483648
        %v1596 = vmul.f32 %v1580, 1.442695
        %v1597 = vpow.pop %v1596
        %v1598 = vmul.f32 %v1581, 1.442695
        %v1599 = vpow.pop %v1598
        %v1600 = vmul.f32 %v1582, 1.442695
        %v1601 = vpow.pop %v1600
        %v1602 = vmul.f32 %v1583, 1.442695
        %v1603 = vpow.pop %v1602
        %v1604 = vmul.f32 %v1584, 1.442695
        %v1605 = vpow.pop %v1604
        %v1606 = vmul.f32 %v1585, 1.442695
        %v1607 = vpow.pop %v1606
        %v1608 = vmul.f32 %v1586, 1.442695
        %v1609 = vpow.pop %v1608
        %v1610 = vmul.f32 %v1587, 1.442695
        %v1611 = vpow.pop %v1610
        %v1612 = vmul.f32 %v1588, 1.442695
        %v1613 = vpow.pop %v1612
        %v1614 = vmul.f32 %v1589, 1.442695
        %v1615 = vpow.pop %v1614
        %v1616 = vmul.f32 %v1590, 1.442695
        %v1617 = vpow.pop %v1616
        %v1618 = vmul.f32 %v1591, 1.442695
        %v1619 = vpow.pop %v1618
        %v1620 = vmul.f32 %v1592, 1.442695
        %v1621 = vpow.pop %v1620
        %v1622 = vmul.f32 %v1593, 1.442695
        %v1623 = vpow.pop %v1622
        %v1624 = vmul.f32 %v1594, 1.442695
        %v1625 = vpow.pop %v1624
        %v1626 = vmul.f32 %v1595, 1.442695
        %v1627 = vpow.pop %v1626
        %v1628 = vadd.f32 %v1597, 1.0
        %v1629 = vadd.f32 %v1599, 1.0
        %v1630 = vadd.f32 %v1601, 1.0
        %v1631 = vadd.f32 %v1603, 1.0
        %v1632 = vadd.f32 %v1605, 1.0
        %v1633 = vadd.f32 %v1607, 1.0
        %v1634 = vadd.f32 %v1609, 1.0
        %v1635 = vadd.f32 %v1611, 1.0
        %v1636 = vadd.f32 %v1613, 1.0
        %v1637 = vadd.f32 %v1615, 1.0
        %v1638 = vadd.f32 %v1617, 1.0
        %v1639 = vadd.f32 %v1619, 1.0
        %v1640 = vadd.f32 %v1621, 1.0
        %v1641 = vadd.f32 %v1623, 1.0
        %v1642 = vadd.f32 %v1625, 1.0
        %v1643 = vadd.f32 %v1627, 1.0
        %v1644 = vrcp.pop %v1628
        %v1645 = vmul.f32 1.0, %v1644
        %v1646 = vrcp.pop %v1629
        %v1647 = vmul.f32 1.0, %v1646
        %v1648 = vrcp.pop %v1630
        %v1649 = vmul.f32 1.0, %v1648
        %v1650 = vrcp.pop %v1631
        %v1651 = vmul.f32 1.0, %v1650
        %v1652 = vrcp.pop %v1632
        %v1653 = vmul.f32 1.0, %v1652
        %v1654 = vrcp.pop %v1633
        %v1655 = vmul.f32 1.0, %v1654
        %v1656 = vrcp.pop %v1634
        %v1657 = vmul.f32 1.0, %v1656
        %v1658 = vrcp.pop %v1635
        %v1659 = vmul.f32 1.0, %v1658
        %v1660 = vrcp.pop %v1636
        %v1661 = vmul.f32 1.0, %v1660
        %v1662 = vrcp.pop %v1637
        %v1663 = vmul.f32 1.0, %v1662
        %v1664 = vrcp.pop %v1638
        %v1665 = vmul.f32 1.0, %v1664
        %v1666 = vrcp.pop %v1639
        %v1667 = vmul.f32 1.0, %v1666
        %v1668 = vrcp.pop %v1640
        %v1669 = vmul.f32 1.0, %v1668
        %v1670 = vrcp.pop %v1641
        %v1671 = vmul.f32 1.0, %v1670
        %v1672 = vrcp.pop %v1642
        %v1673 = vmul.f32 1.0, %v1672
        %v1674 = vrcp.pop %v1643
        %v1675 = vmul.f32 1.0, %v1674
        %1676 = vst [vmem:[%s359] sm:$0xff] %v1645
        %1677 = vst [vmem:[%s359 + $0x8] sm:$0xff] %v1647
        %1678 = vst [vmem:[%s359 + $0x10] sm:$0xff] %v1649
        %1679 = vst [vmem:[%s359 + $0x18] sm:$0xff] %v1651
        %1680 = vst [vmem:[%s359 + $0x20] sm:$0xff] %v1653
        %1681 = vst [vmem:[%s359 + $0x28] sm:$0xff] %v1655
        %1682 = vst [vmem:[%s359 + $0x30] sm:$0xff] %v1657
        %1683 = vst [vmem:[%s359 + $0x38] sm:$0xff] %v1659
        %1684 = vst [vmem:[%s359 + $0x40] sm:$0xff] %v1661
        %1685 = vst [vmem:[%s359 + $0x48] sm:$0xff] %v1663
        %1686 = vst [vmem:[%s359 + $0x50] sm:$0xff] %v1665
        %1687 = vst [vmem:[%s359 + $0x58] sm:$0xff] %v1667
        %1688 = vst [vmem:[%s359 + $0x60] sm:$0xff] %v1669
        %1689 = vst [vmem:[%s359 + $0x68] sm:$0xff] %v1671
        %1690 = vst [vmem:[%s359 + $0x70] sm:$0xff] %v1673
        %1691 = vst [vmem:[%s359 + $0x78] sm:$0xff] %v1675
        %1692 = vst [vmem:[%s366] sm:$0xff] %v1005
        %1693 = vst [vmem:[%s366 + $0x8] sm:$0xff] %v1008
        %1694 = vst [vmem:[%s366 + $0x10] sm:$0xff] %v1013
        %1695 = vst [vmem:[%s366 + $0x18] sm:$0xff] %v1016
        %1696 = vst [vmem:[%s366 + $0x20] sm:$0xff] %v1021
        %1697 = vst [vmem:[%s366 + $0x28] sm:$0xff] %v1024
        %1698 = vst [vmem:[%s366 + $0x30] sm:$0xff] %v1029
        %1699 = vst [vmem:[%s366 + $0x38] sm:$0xff] %v1032
        %1700 = vst [vmem:[%s366 + $0x40] sm:$0xff] %v1037
        %1701 = vst [vmem:[%s366 + $0x48] sm:$0xff] %v1040
        %1702 = vst [vmem:[%s366 + $0x50] sm:$0xff] %v1045
        %1703 = vst [vmem:[%s366 + $0x58] sm:$0xff] %v1048
        %1704 = vst [vmem:[%s366 + $0x60] sm:$0xff] %v1053
        %1705 = vst [vmem:[%s366 + $0x68] sm:$0xff] %v1056
        %1706 = vst [vmem:[%s366 + $0x70] sm:$0xff] %v1061
        %1707 = vst [vmem:[%s366 + $0x78] sm:$0xff] %v1064
        %s1708 = sand.u32 %s218, 1
        %s1709 = scalar_lea.sflag [#allocation3], %s1708
        %s1710 = sand.u32 %s218, 1
        %s1711 = smul.addr %s1710, 128
        %s1712 = scalar_lea.vmem [#allocation2], %s1711
        %s1713 = sand.u32 %s244, 1
        %s1714 = scalar_lea.sflag [#allocation5], %s1713
        %s1715 = sand.u32 %s244, 1
        %s1716 = smul.addr %s1715, 128
        %s1717 = scalar_lea.vmem [#allocation4], %s1716
        // Predicated region
        $region53: #{tpu_custom_call.1} parent=51 // pred_check
          %p1718 = pneg %p228
        $region54: #{tpu_custom_call.1} parent=51 // pred_check_branch
          %1720 = sbr.rel (%p1718) target = $region56
        $region55: #{tpu_custom_call.1} parent=51 // pred_region
          %s1722 = ssub.s32 2048, 2048
          %1723 = vsyncadd %s1709, %s1722
          %s1724 = smul.addr %s27, 16
          %s1725 = smul.addr %s1724, 128
          %s1726 = scalar_lea.hbm %s8, %s1725
          %s1727 = sshll.u32 %s1712, 4
          %s1728 = int_to_ptr.vmem [resolvable:$true] %s1727
          %1733 = dma.vmem_to_hbm [thread:$0]  %s1728, 2048, %s1726, %s1709, 128, 128, 8
        $region56: #{tpu_custom_call.1} parent=51 // pred_fallthru
          _
        // Predicated region
        $region57: #{tpu_custom_call.1} parent=51 // pred_check
          %p1734 = pneg %p254
        $region58: #{tpu_custom_call.1} parent=51 // pred_check_branch
          %1736 = sbr.rel (%p1734) target = $region60
        $region59: #{tpu_custom_call.1} parent=51 // pred_region
          %s1738 = ssub.s32 2048, 2048
          %1739 = vsyncadd %s1714, %s1738
          %s1740 = smul.addr %s27, 16
          %s1741 = smul.addr %s1740, 128
          %s1742 = scalar_lea.hbm %s9, %s1741
          %s1743 = sshll.u32 %s1717, 4
          %s1744 = int_to_ptr.vmem [resolvable:$true] %s1743
          %1749 = dma.vmem_to_hbm [thread:$0]  %s1744, 2048, %s1742, %s1714, 128, 128, 8
        $region60: #{tpu_custom_call.1} parent=51 // pred_fallthru
          _
      $region52: #{tpu_custom_call.1} parent=5 // pred_fallthru
        _
      %p1750 = scmp.le.s32.totalorder 2, %s22
      // Predicated region
      $region61: #{tpu_custom_call.1} parent=5 // pred_check
        %p1751 = pneg %p1750
      $region62: #{tpu_custom_call.1} parent=5 // pred_check_branch
        %1753 = sbr.rel (%p1751) target = $region64
      $region63: #{tpu_custom_call.1} parent=5 // pred_region
        %s1754 = ssub.s32 %s22, 2
        // Predicated region
        $region65: #{tpu_custom_call.1} parent=63 // pred_check
          %p1755 = pneg %p234
        $region66: #{tpu_custom_call.1} parent=63 // pred_check_branch
          %1757 = sbr.rel (%p1755) target = $region68
        $region67: #{tpu_custom_call.1} parent=63 // pred_region
          %s1758 = sand.u32 %s219, 1
          %s1759 = scalar_lea.sflag [#allocation3], %s1758
          %s1760 = sand.u32 %s219, 1
          %s1761 = smul.addr %s1760, 128
          %s1762 = scalar_lea.vmem [#allocation2], %s1761
          %1763 = dma.done %s1759, 2048
        $region68: #{tpu_custom_call.1} parent=63 // pred_fallthru
          _
        // Predicated region
        $region69: #{tpu_custom_call.1} parent=63 // pred_check
          %p1764 = pneg %p260
        $region70: #{tpu_custom_call.1} parent=63 // pred_check_branch
          %1766 = sbr.rel (%p1764) target = $region72
        $region71: #{tpu_custom_call.1} parent=63 // pred_region
          %s1767 = sand.u32 %s245, 1
          %s1768 = scalar_lea.sflag [#allocation5], %s1767
          %s1769 = sand.u32 %s245, 1
          %s1770 = smul.addr %s1769, 128
          %s1771 = scalar_lea.vmem [#allocation4], %s1770
          %1772 = dma.done %s1768, 2048
        $region72: #{tpu_custom_call.1} parent=63 // pred_fallthru
          _
      $region64: #{tpu_custom_call.1} parent=5 // pred_fallthru
        _
    $region6: #{tpu_custom_call.1} parent=1 // loop_footer
      %s26 = sadd.s32 1, %s22
    $region7: #{tpu_custom_call.1} parent=1 // loop_footer_branch
      %21 = sbr.rel target = $region3
    $region8: #{tpu_custom_call.1} parent=1 // loop_exit
      _
    %1773 = vsyncpa [#allocation3], 1
    %s1774 = scalar_lea.sflag [#allocation3], 1
    %1775 = vsyncpa %s1774, 1
    %1776 = vsyncpa [#allocation5], 1
    %s1777 = scalar_lea.sflag [#allocation5], 1
    %1778 = vsyncpa %s1777, 1

</llo_original>
